<compile_context>
chip_gen: v7x
topology: tpu7x:2x2x1
jax: 0.10.0
libtpu: 0.0.40
codegen_flags: <defaults>
</compile_context>

<pallas_src>
import functools

import jax
import jax.numpy as jnp
from jax.experimental import pallas as pl
from jax.experimental.pallas import tpu as pltpu

LN_EPS = 1e-5


# ---------------------------------------------------------------------------
# Kernel
# ---------------------------------------------------------------------------
def _expand_norm_kernel(x_ref, wc_ref, gm_ref, eg_ref, bt_ref, o_ref):
    # x_ref : (tm, C)    input tokens (original dtype; cast here, rides on VPU slack)
    # wc_ref: (C, P*C)   group-mean-centered expand weight (compute dtype, e.g. bf16)
    # gm_ref: (P*C, P)   grouped-average matrix (1/C on the group diagonal)
    # eg_ref: (P, P*C)   expansion matrix with LayerNorm gamma folded in
    # bt_ref: (1, P*C)   beta tiled over the P groups (f32)
    # o_ref : (tm, P*C)
    cdt = wc_ref.dtype
    x = x_ref[...].astype(cdt)                                   # in-kernel cast
    # Centered Linear output (LayerNorm mean subtraction folded into wc); f32 accumulate.
    d = jnp.dot(x, wc_ref[...], preferred_element_type=jnp.float32)           # (tm, P*C)
    # Per-group variance as a matmul (lane-dense, no relayout); bf16 operand, f32 accum.
    dd = (d * d).astype(cdt)
    var_g = jnp.dot(dd, gm_ref[...], preferred_element_type=jnp.float32)      # (tm, P)
    scale_g = jax.lax.rsqrt(var_g + LN_EPS).astype(cdt)                       # rsqrt in f32
    # Broadcast rstd across each group with gamma folded in (tiny matmul, MXU slack).
    scale = jnp.dot(scale_g, eg_ref[...], preferred_element_type=jnp.float32)  # (tm, P*C)
    # Elementwise epilogue kept in f32 (v5e VPU has no bf16 path); single cast on store.
    o_ref[...] = (d * scale + bt_ref[...]).astype(o_ref.dtype)


# ---------------------------------------------------------------------------
# Tiling / VMEM planning (per TPU generation)
# ---------------------------------------------------------------------------
def _round_up(a, m):
    return -(-a // m) * m


def _vmem_capacity_bytes():
    try:
        return int(pltpu.get_tpu_info().vmem_capacity_bytes)
    except Exception:
        return 64 * 1024 * 1024  # conservative fallback: v7x per-TensorCore VMEM


def _plan_tiling(n, c, pc, p, in_bytes, out_bytes, cdt_bytes):
    """Pick (tm, steps, vmem_limit_bytes) from the actual footprint and VMEM size."""
    cap = _vmem_capacity_bytes()
    # Grid-invariant operands (wc, gm, eg, bt) are double-buffered by the pipeline.
    # TODO(synk): single-buffer them via pipeline_mode=pl.Buffered(1) once that lowering
    # is universally available; kept at the default 2-deep here for portability.
    inv = 2 * ((c * pc + pc * p + p * pc) * cdt_bytes + pc * 4)
    # Per-row VMEM: double-buffered in/out tiles + f32 d + cdt d^2 + f32 scale (+ x cast).
    per_row = 2 * c * in_bytes + 2 * pc * out_bytes + pc * (4 + cdt_bytes + 4) + 4 * c
    budget = max(8 * per_row, (cap * 7) // 10 - inv)
    tm_cap = max(8, min(1024, budget // per_row))
    tm_cap = (tm_cap // 8) * 8

    steps = pl.cdiv(n, tm_cap)
    if n >= 32:
        # Megacore balance: even step count >= 4 so both TCs (v7x) split work evenly.
        steps = max(steps, 4)
        if steps % 2:
            steps += 1
    tm = max(8, min(tm_cap, _round_up(pl.cdiv(n, steps), 8)))
    steps = pl.cdiv(n, tm)

    footprint = inv + tm * per_row
    vmem_limit = int(min(max(footprint + (8 << 20), 32 << 20), (cap * 85) // 100))
    vmem_limit = max(vmem_limit, footprint + (2 << 20))
    return tm, steps, vmem_limit


# ---------------------------------------------------------------------------
# pallas_call wrapper
# ---------------------------------------------------------------------------
def _expand_norm_pallas(x_tokens, wc, gm, eg, bt, *, out_dtype):
    """x_tokens: (N, C) in its original dtype. Returns (N, P*C) expand + group-LayerNorm."""
    n, c = x_tokens.shape
    pc = wc.shape[1]
    p = pc // c
    in_bytes = x_tokens.dtype.itemsize
    out_bytes = jnp.dtype(out_dtype).itemsize
    cdt_bytes = wc.dtype.itemsize

    tm, steps, vmem_limit = _plan_tiling(n, c, pc, p, in_bytes, out_bytes, cdt_bytes)
    n_pad = steps * tm
    if n_pad != n:
        x_tokens = jnp.pad(x_tokens, ((0, n_pad - n), (0, 0)))

    cost = pl.CostEstimate(
        flops=int(2 * n * pc * (c + 2 * p)),
        transcendentals=int(n * p),
        bytes_accessed=int(n * c * in_bytes + n * pc * out_bytes
                           + (c * pc + pc * p + p * pc) * cdt_bytes + pc * 4),
    )

    y = pl.pallas_call(
        _expand_norm_kernel,
        out_shape=jax.ShapeDtypeStruct((n_pad, pc), out_dtype),
        grid_spec=pltpu.PrefetchScalarGridSpec(
            num_scalar_prefetch=0,
            grid=(steps,),
            in_specs=[
                pl.BlockSpec((tm, c), lambda i: (i, 0)),
                pl.BlockSpec((c, pc), lambda i: (0, 0)),
                pl.BlockSpec((pc, p), lambda i: (0, 0)),
                pl.BlockSpec((p, pc), lambda i: (0, 0)),
                pl.BlockSpec((1, pc), lambda i: (0, 0)),
            ],
            out_specs=pl.BlockSpec((tm, pc), lambda i: (i, 0)),
        ),
        compiler_params=pltpu.CompilerParams(
            dimension_semantics=("parallel",),
            vmem_limit_bytes=vmem_limit,
        ),
        cost_estimate=cost,
    )(x_tokens, wc, gm, eg, bt)

    if n_pad != n:
        y = y[:n]
    return y


# ---------------------------------------------------------------------------
# One-time weight preprocessing (hoisted out of the per-call path)
# ---------------------------------------------------------------------------
def prepare_expand_params(w_expand, gamma, beta, patch_size=(2, 4, 4), *,
                          compute_dtype=jnp.bfloat16):
    """w_expand: (up_scale*dim, dim) nn.Linear weight (out, in), bias=False.
    gamma, beta: (dim,) LayerNorm params.  compute_dtype = MXU operand dtype."""
    p0, p1, p2 = patch_size
    P = p0 * p1 * p2
    out_dim, C = w_expand.shape
    assert out_dim == P * C, "w_expand must be (up_scale*dim, dim)"

    w_t = jnp.asarray(w_expand, jnp.float32).T                      # (C, P*C)
    w3 = w_t.reshape(C, P, C)
    # Fold the per-group mean subtraction of the LayerNorm into the weight (valid: bias=False).
    wc = (w3 - jnp.mean(w3, axis=-1, keepdims=True)).reshape(C, P * C).astype(compute_dtype)

    eye = jnp.eye(P, dtype=jnp.float32)
    # gm[(g*C + c), g'] = delta(g, g') / C      -> grouped average of d*d
    gm = (jnp.broadcast_to(eye[:, None, :], (P, C, P)).reshape(P * C, P) / C).astype(compute_dtype)
    # eg[g, g'*C + c] = delta(g, g') * gamma[c] -> broadcast rstd with gamma folded in
    eg = (eye[:, :, None] * jnp.asarray(gamma, jnp.float32)[None, None, :]
          ).reshape(P, P * C).astype(compute_dtype)
    # bt[0, g*C + c] = beta[c]  (kept f32: added in the f32 epilogue)
    bt = jnp.tile(jnp.asarray(beta, jnp.float32), P).reshape(1, P * C)
    return wc, gm, eg, bt


# ---------------------------------------------------------------------------
# Forward
# ---------------------------------------------------------------------------
def final_patch_expand_x4(x, params, patch_size=(2, 4, 4), *,
                          out_dtype=jnp.float32, channels_last=False):
    """
    x: (B, D, H, W, C) with C = dim.  params: prepare_expand_params(...).
    channels_last=False -> (B, dim, p0*D, p1*H, p2*W)   (NCDHW, like the PyTorch module)
    channels_last=True  -> (B, p0*D, p1*H, p2*W, dim)   (cheaper relayout for CL consumers)
    """
    p0, p1, p2 = patch_size
    B, D, H, W, C = x.shape
    wc, gm, eg, bt = params

    n = B * D * H * W
    x_tokens = x.reshape(n, C)   # no cast here: the dtype cast is folded into the kernel
    y = _expand_norm_pallas(x_tokens, wc, gm, eg, bt, out_dtype=out_dtype)

    # Layout-only glue left to XLA; runs on out_dtype (bf16 output halves its bytes).
    # Writing the spatially-expanded layout straight from the kernel would force
    # lane-sparse (<=C-lane) stores, which is worse than one dense relayout pass.
    y = y.reshape(B, D, H, W, p0, p1, p2, C)
    if channels_last:
        y = jnp.transpose(y, (0, 1, 4, 2, 5, 3, 6, 7))   # b (d p0) (h p1) (w p2) c
        return y.reshape(B, D * p0, H * p1, W * p2, C)
    y = jnp.transpose(y, (0, 7, 1, 4, 2, 5, 3, 6))       # b c (d p0) (h p1) (w p2)
    return y.reshape(B, C, D * p0, H * p1, W * p2)


# ---------------------------------------------------------------------------
# Pure-JAX reference of the PyTorch forward
# ---------------------------------------------------------------------------
def _reference(x, w_expand, gamma, beta, patch_size=(2, 4, 4)):
    p0, p1, p2 = patch_size
    B, D, H, W, C = x.shape
    y = jnp.einsum("bdhwc,oc->bdhwo", x, w_expand)                  # Linear, bias=False
    y = y.reshape(B, D, H, W, p0, p1, p2, C)
    y = jnp.transpose(y, (0, 1, 4, 2, 5, 3, 6, 7))                  # b (d p0) (h p1) (w p2) c
    y = y.reshape(B, D * p0, H * p1, W * p2, C)
    mean = jnp.mean(y, axis=-1, keepdims=True)
    var = jnp.mean((y - mean) ** 2, axis=-1, keepdims=True)
    y = (y - mean) * jax.lax.rsqrt(var + LN_EPS) * gamma + beta
    return jnp.transpose(y, (0, 4, 1, 2, 3))                        # NCDHW


if __name__ == "__main__":
    key = jax.random.PRNGKey(0)
    k_x, k_w, k_g, k_b = jax.random.split(key, 4)

    # Small shapes: batch=2, D=2, H=4, W=4, dim=32, patch_size=(2,4,4) -> up_scale=32.
    B, D, H, W, dim = 2, 2, 4, 4, 32
    patch_size = (2, 4, 4)
    up_scale = patch_size[0] * patch_size[1] * patch_size[2]

    x = jax.random.normal(k_x, (B, D, H, W, dim), dtype=jnp.float32)
    w_expand = 0.02 * jax.random.normal(k_w, (up_scale * dim, dim), dtype=jnp.float32)
    gamma = 1.0 + 0.1 * jax.random.normal(k_g, (dim,), dtype=jnp.float32)
    beta = 0.1 * jax.random.normal(k_b, (dim,), dtype=jnp.float32)

    ref = _reference(x, w_expand, gamma, beta, patch_size)
    ref_cl = jnp.transpose(ref, (0, 2, 3, 4, 1))
    expected_ncdhw = (B, dim, patch_size[0] * D, patch_size[1] * H, patch_size[2] * W)
    expected_cl = (B, patch_size[0] * D, patch_size[1] * H, patch_size[2] * W, dim)

    # --- strict f32 path (f32 MXU operands): bitwise-level match with the module ---
    params_f32 = prepare_expand_params(w_expand, gamma, beta, patch_size,
                                       compute_dtype=jnp.float32)
    run_f32 = jax.jit(functools.partial(final_patch_expand_x4, patch_size=patch_size))
    out_f32 = jax.block_until_ready(run_f32(x, params_f32))
    assert out_f32.shape == expected_ncdhw
    assert jnp.allclose(out_f32, ref, atol=1e-4, rtol=1e-4), "strict f32 mismatch"

    # --- default fast path: bf16 MXU operands, f32 stats/epilogue, f32 output ---
    params_fast = prepare_expand_params(w_expand, gamma, beta, patch_size)   # bf16 operands
    run_fast = jax.jit(functools.partial(final_patch_expand_x4, patch_size=patch_size))
    out_fast = jax.block_until_ready(run_fast(x, params_fast))
    assert out_fast.shape == expected_ncdhw
    assert jnp.allclose(out_fast, ref, atol=6e-2, rtol=6e-2), "bf16-MXU/f32-out mismatch"

    # --- bf16 output + channels-last: halves the write stream AND the relayout pass ---
    run_bf16_cl = jax.jit(functools.partial(final_patch_expand_x4, patch_size=patch_size,
                                            out_dtype=jnp.bfloat16, channels_last=True))
    out_bf16 = jax.block_until_ready(run_bf16_cl(x, params_fast))
    assert out_bf16.shape == expected_cl and out_bf16.dtype == jnp.bfloat16
    assert jnp.allclose(out_bf16.astype(jnp.float32), ref_cl, atol=1e-1, rtol=1e-1), \
        "bf16 channels-last mismatch"

    print("KERNEL_OK")
</pallas_src>

<mosaic_0001>
module attributes {stable_mosaic.version = 11 : i64} {
  func.func @_expand_norm_kernel(%arg0: i32, %arg1: memref<16x32xf32, #tpu.memory_space<vmem>>, %arg2: memref<32x1024xf32, #tpu.memory_space<vmem>>, %arg3: memref<1024x32xf32, #tpu.memory_space<vmem>>, %arg4: memref<32x1024xf32, #tpu.memory_space<vmem>>, %arg5: memref<1x1024xf32, #tpu.memory_space<vmem>>, %arg6: memref<16x1024xf32, #tpu.memory_space<vmem>>) attributes {dimension_semantics = [#tpu.dimension_semantics<parallel>], iteration_bounds = array<i64: 4>, scalar_prefetch = 0 : i64, scratch_operands = 0 : i64, tpu.core_type = #tpu.core_type<tc>, window_params = [{transform_indices = @transform_0, window_bounds = array<i64: 16, 32>}, {pipeline_mode = #tpu.pipeline_mode<synchronous>, transform_indices = @transform_1, window_bounds = array<i64: 32, 1024>}, {pipeline_mode = #tpu.pipeline_mode<synchronous>, transform_indices = @transform_2, window_bounds = array<i64: 1024, 32>}, {pipeline_mode = #tpu.pipeline_mode<synchronous>, transform_indices = @transform_3, window_bounds = array<i64: 32, 1024>}, {pipeline_mode = #tpu.pipeline_mode<synchronous>, transform_indices = @transform_4, window_bounds = array<i64: 1, 1024>}, {transform_indices = @transform_5, window_bounds = array<i64: 16, 1024>}]} {
    %c0 = arith.constant 0 : index
    %c0_0 = arith.constant 0 : index
    %0 = vector.load %arg1[%c0, %c0_0] : memref<16x32xf32, #tpu.memory_space<vmem>>, vector<16x32xf32>
    %c0_1 = arith.constant 0 : index
    %c0_2 = arith.constant 0 : index
    %1 = vector.load %arg2[%c0_1, %c0_2] : memref<32x1024xf32, #tpu.memory_space<vmem>>, vector<32x1024xf32>
    %cst = arith.constant dense<0.000000e+00> : vector<16x1024xf32>
    %2 = tpu.matmul %0, %1, %cst {dimension_numbers = #tpu.dot_dimension_numbers<[1], [0], [0], [1], [0, 0, 1, 1], [], []>} : vector<16x32xf32>, vector<32x1024xf32>, vector<16x1024xf32> -> vector<16x1024xf32>
    %3 = arith.mulf %2, %2 : vector<16x1024xf32>
    %c0_3 = arith.constant 0 : index
    %c0_4 = arith.constant 0 : index
    %4 = vector.load %arg3[%c0_3, %c0_4] : memref<1024x32xf32, #tpu.memory_space<vmem>>, vector<1024x32xf32>
    %cst_5 = arith.constant dense<0.000000e+00> : vector<16x32xf32>
    %5 = tpu.matmul %3, %4, %cst_5 {dimension_numbers = #tpu.dot_dimension_numbers<[1], [0], [0], [1], [0, 0, 1, 1], [], []>} : vector<16x1024xf32>, vector<1024x32xf32>, vector<16x32xf32> -> vector<16x32xf32>
    %cst_6 = arith.constant 9.99999974E-6 : f32
    %6 = vector.broadcast %cst_6 : f32 to vector<16x32xf32>
    %7 = arith.addf %5, %6 : vector<16x32xf32>
    %8 = math.rsqrt %7 : vector<16x32xf32>
    %c0_7 = arith.constant 0 : index
    %c0_8 = arith.constant 0 : index
    %9 = vector.load %arg4[%c0_7, %c0_8] : memref<32x1024xf32, #tpu.memory_space<vmem>>, vector<32x1024xf32>
    %cst_9 = arith.constant dense<0.000000e+00> : vector<16x1024xf32>
    %10 = tpu.matmul %8, %9, %cst_9 {dimension_numbers = #tpu.dot_dimension_numbers<[1], [0], [0], [1], [0, 0, 1, 1], [], []>} : vector<16x32xf32>, vector<32x1024xf32>, vector<16x1024xf32> -> vector<16x1024xf32>
    %11 = arith.mulf %2, %10 : vector<16x1024xf32>
    %c0_10 = arith.constant 0 : index
    %c0_11 = arith.constant 0 : index
    %12 = vector.load %arg5[%c0_10, %c0_11] : memref<1x1024xf32, #tpu.memory_space<vmem>>, vector<1x1024xf32>
    %13 = vector.broadcast %12 : vector<1x1024xf32> to vector<16x1024xf32>
    %14 = arith.addf %11, %13 : vector<16x1024xf32>
    %c0_12 = arith.constant 0 : index
    %c0_13 = arith.constant 0 : index
    %15 = vector.load %arg6[%c0_12, %c0_13] : memref<16x1024xf32, #tpu.memory_space<vmem>>, vector<16x1024xf32>
    tpu.vector_store %arg6[%c0_12, %c0_13], %14 {strides = array<i32>} : memref<16x1024xf32, #tpu.memory_space<vmem>>, vector<16x1024xf32>,
    return
  }
  func.func @transform_0(%arg0: i32) -> (i32, i32) {
    %c0_i32 = arith.constant 0 : i32
    %c0_i32_0 = arith.constant 0 : i32
    return %arg0, %c0_i32 : i32, i32
  }
  func.func @transform_1(%arg0: i32) -> (i32, i32) {
    %c0_i32 = arith.constant 0 : i32
    %c0_i32_0 = arith.constant 0 : i32
    %c0_i32_1 = arith.constant 0 : i32
    return %c0_i32, %c0_i32_0 : i32, i32
  }
  func.func @transform_2(%arg0: i32) -> (i32, i32) {
    %c0_i32 = arith.constant 0 : i32
    %c0_i32_0 = arith.constant 0 : i32
    %c0_i32_1 = arith.constant 0 : i32
    return %c0_i32, %c0_i32_0 : i32, i32
  }
  func.func @transform_3(%arg0: i32) -> (i32, i32) {
    %c0_i32 = arith.constant 0 : i32
    %c0_i32_0 = arith.constant 0 : i32
    %c0_i32_1 = arith.constant 0 : i32
    return %c0_i32, %c0_i32_0 : i32, i32
  }
  func.func @transform_4(%arg0: i32) -> (i32, i32) {
    %c0_i32 = arith.constant 0 : i32
    %c0_i32_0 = arith.constant 0 : i32
    %c0_i32_1 = arith.constant 0 : i32
    return %c0_i32, %c0_i32_0 : i32, i32
  }
  func.func @transform_5(%arg0: i32) -> (i32, i32) {
    %c0_i32 = arith.constant 0 : i32
    %c0_i32_0 = arith.constant 0 : i32
    return %arg0, %c0_i32 : i32, i32
  }
}

</mosaic_0001>

<llo_original>
// kernel: final_patch_expand_x4.1
$region0: #{final_patch_expand_x4.1}
  #allocation0 [shape = 'u32[]', space=smem, size = 0x4, offset = 0x4, fixed_abs, tag = 'smem constant byte address 0x4 - core index']
  #allocation1 [shape = 'u32[144,128]{1,0:T(1,128)}', space=vmem, size = 0x12000, scoped, tag = 'internal scratch']
  %s0 = inlined_call_operand.vmem [shape: f32[64,32], index: 0, kind: input, shape index: {}]
  %s1 = inlined_call_operand.vmem [shape: f32[32,1024], index: 1, kind: input, shape index: {}]
  %s2 = inlined_call_operand.vmem [shape: f32[1024,32], index: 2, kind: input, shape index: {}]
  %s3 = inlined_call_operand.vmem [shape: f32[32,1024], index: 3, kind: input, shape index: {}]
  %s4 = inlined_call_operand.vmem [shape: f32[1,1024], index: 4, kind: input, shape index: {}]
  %s5 = inlined_call_operand.vmem [shape: f32[64,1024], index: 5, kind: output, shape index: {}]
  %s6 = sld [smem:[#allocation0]]
  $region53: #{final_patch_expand_x4.1} parent=0
    _
  %s8 = ssub.s32 1, %s6
  %s9 = scalar_select 0, %s8, %s6
  loop: start=0, step=1, limit=6
  $region2: #{final_patch_expand_x4.1} parent=0 // loop_pre_header
    _
  $region3: #{final_patch_expand_x4.1} parent=0 // loop_header
    %s11 = sphi 0, %s15
    %p12 = scmp.ge.s32.totalorder %s11, 6
    %s21 = sphi 0, %s23
    %s24 = sphi 0, %s21
    %s25 = sphi 0, %s24
    %s41 = sphi 0, %s25
    %s45 = sphi 0, %s45
    %s47 = sphi 0, %s45
    %s48 = sphi 0, %s47
    %s62 = sphi 0, %s48
    %s66 = sphi 0, %s66
    %s68 = sphi 0, %s66
    %s69 = sphi 0, %s68
    %s83 = sphi 0, %s69
    %s87 = sphi 0, %s87
    %s89 = sphi 0, %s87
    %s90 = sphi 0, %s89
    %s104 = sphi 0, %s90
    %s108 = sphi 0, %s108
    %s110 = sphi 0, %s108
    %s111 = sphi 0, %s110
    %s125 = sphi 0, %s111
    %s131 = sphi 0, %s133
    %s134 = sphi 0, %s131
    %s135 = sphi 0, %s134
    %s151 = sphi 0, %s135
  $region4: #{final_patch_expand_x4.1} parent=0 // loop_header_branch
    %14 = sbr.rel (%p12) target = $region8
  $region5: #{final_patch_expand_x4.1} parent=0 // loop_body
    %s16 = ssub.s32 %s11, 1
    %s17 = ssub.s32 %s11, 2
    %s18 = sadd.s32 %s11, 1
    %s19 = ssub.s32 %s11, %s18
    %p20 = scmp.eq.s32.totalorder %s19, 0
    %s22 = sadd.s32 %s21, 1
    %s23 = scalar_select %p20, %s21, %s22
    %p26 = pneg %p20
    %p27 = scmp.eq.s32.totalorder %s11, 3
    %p28 = por %p26, %p27
    %p29 = scmp.ne.s32.totalorder %s21, %s24
    %p30 = scmp.eq.s32.totalorder %s11, 0
    %p31 = por %p29, %p30
    %p32 = scmp.ne.s32.totalorder %s21, %s24
    %p33 = scmp.eq.s32.totalorder %s16, 3
    %p34 = por %p32, %p33
    %p35 = scmp.ne.s32.totalorder %s24, %s25
    %p36 = scmp.eq.s32.totalorder %s16, 0
    %p37 = por %p35, %p36
    %p38 = scmp.ne.s32.totalorder %s24, %s25
    %p39 = scmp.eq.s32.totalorder %s17, 3
    %p40 = por %p38, %p39
    %p42 = scmp.ne.s32.totalorder %s25, %s41
    %p43 = scmp.eq.s32.totalorder %s17, 0
    %p44 = por %p42, %p43
    %s46 = sadd.s32 %s45, 1
    %p49 = scmp.eq.s32.totalorder %s11, 3
    %p50 = scmp.ne.s32.totalorder %s45, %s47
    %p51 = scmp.eq.s32.totalorder %s11, 0
    %p52 = por %p50, %p51
    %p53 = scmp.ne.s32.totalorder %s45, %s47
    %p54 = scmp.eq.s32.totalorder %s16, 3
    %p55 = por %p53, %p54
    %p56 = scmp.ne.s32.totalorder %s47, %s48
    %p57 = scmp.eq.s32.totalorder %s16, 0
    %p58 = por %p56, %p57
    %p59 = scmp.ne.s32.totalorder %s47, %s48
    %p60 = scmp.eq.s32.totalorder %s17, 3
    %p61 = por %p59, %p60
    %p63 = scmp.ne.s32.totalorder %s48, %s62
    %p64 = scmp.eq.s32.totalorder %s17, 0
    %p65 = por %p63, %p64
    %s67 = sadd.s32 %s66, 1
    %p70 = scmp.eq.s32.totalorder %s11, 3
    %p71 = scmp.ne.s32.totalorder %s66, %s68
    %p72 = scmp.eq.s32.totalorder %s11, 0
    %p73 = por %p71, %p72
    %p74 = scmp.ne.s32.totalorder %s66, %s68
    %p75 = scmp.eq.s32.totalorder %s16, 3
    %p76 = por %p74, %p75
    %p77 = scmp.ne.s32.totalorder %s68, %s69
    %p78 = scmp.eq.s32.totalorder %s16, 0
    %p79 = por %p77, %p78
    %p80 = scmp.ne.s32.totalorder %s68, %s69
    %p81 = scmp.eq.s32.totalorder %s17, 3
    %p82 = por %p80, %p81
    %p84 = scmp.ne.s32.totalorder %s69, %s83
    %p85 = scmp.eq.s32.totalorder %s17, 0
    %p86 = por %p84, %p85
    %s88 = sadd.s32 %s87, 1
    %p91 = scmp.eq.s32.totalorder %s11, 3
    %p92 = scmp.ne.s32.totalorder %s87, %s89
    %p93 = scmp.eq.s32.totalorder %s11, 0
    %p94 = por %p92, %p93
    %p95 = scmp.ne.s32.totalorder %s87, %s89
    %p96 = scmp.eq.s32.totalorder %s16, 3
    %p97 = por %p95, %p96
    %p98 = scmp.ne.s32.totalorder %s89, %s90
    %p99 = scmp.eq.s32.totalorder %s16, 0
    %p100 = por %p98, %p99
    %p101 = scmp.ne.s32.totalorder %s89, %s90
    %p102 = scmp.eq.s32.totalorder %s17, 3
    %p103 = por %p101, %p102
    %p105 = scmp.ne.s32.totalorder %s90, %s104
    %p106 = scmp.eq.s32.totalorder %s17, 0
    %p107 = por %p105, %p106
    %s109 = sadd.s32 %s108, 1
    %p112 = scmp.eq.s32.totalorder %s11, 3
    %p113 = scmp.ne.s32.totalorder %s108, %s110
    %p114 = scmp.eq.s32.totalorder %s11, 0
    %p115 = por %p113, %p114
    %p116 = scmp.ne.s32.totalorder %s108, %s110
    %p117 = scmp.eq.s32.totalorder %s16, 3
    %p118 = por %p116, %p117
    %p119 = scmp.ne.s32.totalorder %s110, %s111
    %p120 = scmp.eq.s32.totalorder %s16, 0
    %p121 = por %p119, %p120
    %p122 = scmp.ne.s32.totalorder %s110, %s111
    %p123 = scmp.eq.s32.totalorder %s17, 3
    %p124 = por %p122, %p123
    %p126 = scmp.ne.s32.totalorder %s111, %s125
    %p127 = scmp.eq.s32.totalorder %s17, 0
    %p128 = por %p126, %p127
    %s129 = ssub.s32 %s11, %s18
    %p130 = scmp.eq.s32.totalorder %s129, 0
    %s132 = sadd.s32 %s131, 1
    %s133 = scalar_select %p130, %s131, %s132
    %p136 = pneg %p130
    %p137 = scmp.eq.s32.totalorder %s11, 3
    %p138 = por %p136, %p137
    %p139 = scmp.ne.s32.totalorder %s131, %s134
    %p140 = scmp.eq.s32.totalorder %s11, 0
    %p141 = por %p139, %p140
    %p142 = scmp.ne.s32.totalorder %s131, %s134
    %p143 = scmp.eq.s32.totalorder %s16, 3
    %p144 = por %p142, %p143
    %p145 = scmp.ne.s32.totalorder %s134, %s135
    %p146 = scmp.eq.s32.totalorder %s16, 0
    %p147 = por %p145, %p146
    %p148 = scmp.ne.s32.totalorder %s134, %s135
    %p149 = scmp.eq.s32.totalorder %s17, 3
    %p150 = por %p148, %p149
    %p152 = scmp.ne.s32.totalorder %s135, %s151
    %p153 = scmp.eq.s32.totalorder %s17, 0
    %p154 = por %p152, %p153
    %p155 = scmp.le.s32.totalorder 1, %s11
    %p156 = scmp.lt.s32.totalorder %s11, 5
    %p157 = pnand %p155, %p156
    %p158 = pneg %p157
    // Predicated region
    $region9: #{final_patch_expand_x4.1} parent=5 // pred_check
      _
    $region10: #{final_patch_expand_x4.1} parent=5 // pred_check_branch
      %160 = sbr.rel (%p157) target = $region12
    $region11: #{final_patch_expand_x4.1} parent=5 // pred_region
      %s161 = ssub.s32 %s11, 1
      // Predicated region
      $region13: #{final_patch_expand_x4.1} parent=11 // pred_check
        %p162 = pneg %p58
      $region14: #{final_patch_expand_x4.1} parent=11 // pred_check_branch
        %164 = sbr.rel (%p162) target = $region16
      $region15: #{final_patch_expand_x4.1} parent=11 // pred_region
        _
      $region16: #{final_patch_expand_x4.1} parent=11 // pred_fallthru
        _
      // Predicated region
      $region17: #{final_patch_expand_x4.1} parent=11 // pred_check
        %p165 = pneg %p79
      $region18: #{final_patch_expand_x4.1} parent=11 // pred_check_branch
        %167 = sbr.rel (%p165) target = $region20
      $region19: #{final_patch_expand_x4.1} parent=11 // pred_region
        _
      $region20: #{final_patch_expand_x4.1} parent=11 // pred_fallthru
        _
      // Predicated region
      $region21: #{final_patch_expand_x4.1} parent=11 // pred_check
        %p168 = pneg %p100
      $region22: #{final_patch_expand_x4.1} parent=11 // pred_check_branch
        %170 = sbr.rel (%p168) target = $region24
      $region23: #{final_patch_expand_x4.1} parent=11 // pred_region
        _
      $region24: #{final_patch_expand_x4.1} parent=11 // pred_fallthru
        _
      // Predicated region
      $region25: #{final_patch_expand_x4.1} parent=11 // pred_check
        %p171 = pneg %p121
      $region26: #{final_patch_expand_x4.1} parent=11 // pred_check_branch
        %173 = sbr.rel (%p171) target = $region28
      $region27: #{final_patch_expand_x4.1} parent=11 // pred_region
        _
      $region28: #{final_patch_expand_x4.1} parent=11 // pred_fallthru
        _
    $region12: #{final_patch_expand_x4.1} parent=5 // pred_fallthru
      _
    %p174 = scmp.lt.s32.totalorder %s11, 4
    // Predicated region
    $region29: #{final_patch_expand_x4.1} parent=5 // pred_check
      %p175 = pneg %p174
    $region30: #{final_patch_expand_x4.1} parent=5 // pred_check_branch
      %177 = sbr.rel (%p175) target = $region32
    $region31: #{final_patch_expand_x4.1} parent=5 // pred_region
      // Predicated region
      $region33: #{final_patch_expand_x4.1} parent=31 // pred_check
        %p178 = pneg %p31
      $region34: #{final_patch_expand_x4.1} parent=31 // pred_check_branch
        %180 = sbr.rel (%p178) target = $region36
      $region35: #{final_patch_expand_x4.1} parent=31 // pred_region
        %s181 = smul.u32 2, %s11
        %p182 = scmp.lt.s32.totalorder %s181, 7
        %s183 = scalar_select %p182, %s181, 7
        %s184 = smul.addr %s183, 8
        %s185 = scalar_lea.vmem %s0, %s184
        %s186 = smul.u32 2, %s11
      $region36: #{final_patch_expand_x4.1} parent=31 // pred_fallthru
        _
    $region32: #{final_patch_expand_x4.1} parent=5 // pred_fallthru
      _
    %p187 = scmp.le.s32.totalorder 1, %s11
    %p188 = scmp.lt.s32.totalorder %s11, 5
    %p189 = pnand %p187, %p188
    %p190 = pneg %p189
    // Predicated region
    $region37: #{final_patch_expand_x4.1} parent=5 // pred_check
      _
    $region38: #{final_patch_expand_x4.1} parent=5 // pred_check_branch
      %192 = sbr.rel (%p189) target = $region40
    $region39: #{final_patch_expand_x4.1} parent=5 // pred_region
      %s193 = ssub.s32 %s11, 1
      %s194 = smul.u32 2, %s16
      %p195 = scmp.lt.s32.totalorder %s194, 7
      %s196 = scalar_select %p195, %s194, 7
      %s197 = smul.addr %s196, 8
      %s198 = scalar_lea.vmem %s0, %s197
      %p199 = pneg %p37
      %p200 = pneg %p34
      %p201 = pneg %p58
      %p202 = pneg %p55
      %p203 = pneg %p79
      %p204 = pneg %p76
      %p205 = pneg %p100
      %p206 = pneg %p97
      %p207 = pneg %p121
      %p208 = pneg %p118
      %p209 = pneg %p147
      %p210 = pneg %p144
      %s211 = smul.u32 2, %s16
      %p212 = scmp.lt.s32.totalorder %s211, 7
      %s213 = scalar_select %p212, %s211, 7
      %s214 = smul.addr %s213, 8
      %s215 = smul.addr %s214, 8
      %s216 = scalar_lea.vmem %s5, %s215
      %s217 = smul.u32 2, %s16
      %p218 = scmp.lt.s32.totalorder %s217, 7
      %s219 = scalar_select %p218, %s217, 7
      %s220 = smul.addr %s219, 8
      %s221 = scalar_lea.vmem %s0, %s220
      %s222 = smul.u32 2, %s16
      %s223 = smul.u32 2, %s16
      %p224 = scmp.lt.s32.totalorder %s223, 7
      %s225 = scalar_select %p224, %s223, 7
      %s226 = smul.addr %s225, 8
      %s227 = smul.addr %s226, 8
      %s228 = scalar_lea.vmem %s5, %s227
      %s229 = smul.u32 2, %s16
      %v230 = vld [vmem:[%s221] sm:$0xff]
      %v231 = vld [vmem:[%s221 + $0x8] sm:$0xff]
      %v232 = vld [vmem:[%s1] sm:$0xff]
      %v233 = vld [vmem:[%s1 + $0x8] sm:$0xff]
      %v234 = vld [vmem:[%s1 + $0x10] sm:$0xff]
      %v235 = vld [vmem:[%s1 + $0x18] sm:$0xff]
      %v236 = vld [vmem:[%s1 + $0x20] sm:$0xff]
      %v237 = vld [vmem:[%s1 + $0x28] sm:$0xff]
      %v238 = vld [vmem:[%s1 + $0x30] sm:$0xff]
      %v239 = vld [vmem:[%s1 + $0x38] sm:$0xff]
      %v240 = vld [vmem:[%s1 + $0x40] sm:$0xff]
      %v241 = vld [vmem:[%s1 + $0x48] sm:$0xff]
      %v242 = vld [vmem:[%s1 + $0x50] sm:$0xff]
      %v243 = vld [vmem:[%s1 + $0x58] sm:$0xff]
      %v244 = vld [vmem:[%s1 + $0x60] sm:$0xff]
      %v245 = vld [vmem:[%s1 + $0x68] sm:$0xff]
      %v246 = vld [vmem:[%s1 + $0x70] sm:$0xff]
      %v247 = vld [vmem:[%s1 + $0x78] sm:$0xff]
      %v248 = vld [vmem:[%s1 + $0x80] sm:$0xff]
      %v249 = vld [vmem:[%s1 + $0x88] sm:$0xff]
      %v250 = vld [vmem:[%s1 + $0x90] sm:$0xff]
      %v251 = vld [vmem:[%s1 + $0x98] sm:$0xff]
      %v252 = vld [vmem:[%s1 + $0xa0] sm:$0xff]
      %v253 = vld [vmem:[%s1 + $0xa8] sm:$0xff]
      %v254 = vld [vmem:[%s1 + $0xb0] sm:$0xff]
      %v255 = vld [vmem:[%s1 + $0xb8] sm:$0xff]
      %v256 = vld [vmem:[%s1 + $0xc0] sm:$0xff]
      %v257 = vld [vmem:[%s1 + $0xc8] sm:$0xff]
      %v258 = vld [vmem:[%s1 + $0xd0] sm:$0xff]
      %v259 = vld [vmem:[%s1 + $0xd8] sm:$0xff]
      %v260 = vld [vmem:[%s1 + $0xe0] sm:$0xff]
      %v261 = vld [vmem:[%s1 + $0xe8] sm:$0xff]
      %v262 = vld [vmem:[%s1 + $0xf0] sm:$0xff]
      %v263 = vld [vmem:[%s1 + $0xf8] sm:$0xff]
      %vm264 = vcmask 261120
      %v266 = vsel %vm264, %v230, 0
      %v269 = vsel %vm264, %v231, 0
      %271 = vmatprep.subr.mxu0 %v233
      %272 = vmatpush1.msra.mxu0 %v232
      %273 = vmatprep.subr.mxu0 %v241
      %274 = vmatpush1.msra.mxu0 %v240
      %275 = vmatprep.subr.mxu0 %v249
      %276 = vmatpush1.msra.mxu0 %v248
      %277 = vmatprep.subr.mxu0 %v257
      %278 = vmatpush1.msra.mxu0 %v256
      %279 = vmatprep.subr.mxu0 0.0
      %280 = vmatpush1.msra.mxu0 0.0
      %281 = vmatprep.subr.mxu0 0.0
      %282 = vmatpush1.msra.mxu0 0.0
      %283 = vmatprep.subr.mxu0 0.0
      %284 = vmatpush1.msra.mxu0 0.0
      %285 = vmatprep.subr.mxu0 0.0
      %286 = vmatpush1.msra.mxu0 0.0
      %287 = vmatprep.subr.mxu0 0.0
      %288 = vmatpush1.msra.mxu0 0.0
      %289 = vmatprep.subr.mxu0 0.0
      %290 = vmatpush1.msra.mxu0 0.0
      %291 = vmatprep.subr.mxu0 0.0
      %292 = vmatpush1.msra.mxu0 0.0
      %293 = vmatprep.subr.mxu0 0.0
      %294 = vmatpush1.msra.mxu0 0.0
      %295 = vmatprep.subr.mxu0 0.0
      %296 = vmatpush1.msra.mxu0 0.0
      %297 = vmatprep.subr.mxu0 0.0
      %298 = vmatpush1.msra.mxu0 0.0
      %299 = vmatprep.subr.mxu0 0.0
      %300 = vmatpush1.msra.mxu0 0.0
      %301 = vmatprep.subr.mxu0 0.0
      %302 = vmatpush1.msra.mxu0 0.0
      %303 = vmatprep.subr.mxu0 0.0
      %304 = vmatpush1.msra.mxu0 0.0
      %305 = vmatprep.subr.mxu0 0.0
      %306 = vmatpush1.msra.mxu0 0.0
      %307 = vmatprep.subr.mxu0 0.0
      %308 = vmatpush1.msra.mxu0 0.0
      %309 = vmatprep.subr.mxu0 0.0
      %310 = vmatpush1.msra.mxu0 0.0
      %311 = vmatprep.subr.mxu0 0.0
      %312 = vmatpush1.msra.mxu0 0.0
      %313 = vmatprep.subr.mxu0 0.0
      %314 = vmatpush1.msra.mxu0 0.0
      %315 = vmatprep.subr.mxu0 0.0
      %316 = vmatpush1.msra.mxu0 0.0
      %317 = vmatprep.subr.mxu0 0.0
      %318 = vmatpush1.msra.mxu0 0.0
      %319 = vmatprep.subr.mxu0 0.0
      %320 = vmatpush1.msra.mxu0 0.0
      %321 = vmatprep.subr.mxu0 0.0
      %322 = vmatpush1.msra.mxu0 0.0
      %323 = vmatprep.subr.mxu0 0.0
      %324 = vmatpush1.msra.mxu0 0.0
      %325 = vmatprep.subr.mxu0 0.0
      %326 = vmatpush1.msra.mxu0 0.0
      %327 = vmatprep.subr.mxu0 0.0
      %328 = vmatpush1.msra.mxu0 0.0
      %329 = vmatprep.subr.mxu0 0.0
      %330 = vmatpush1.msra.mxu0 0.0
      %331 = vmatprep.subr.mxu0 0.0
      %332 = vmatpush1.msra.mxu0 0.0
      %333 = vmatprep.subr.mxu0 0.0
      %334 = vmatpush1.msra.mxu0 0.0
      %335 = vmatprep.mubr.f32.mxu0 0.0
      %336 = vmatmul.mubr.f32.gmra.mrb[0].mxu0 %v266
      %v337 = vpop.f32.mrb[0].mxu0
      %v338 = vadd.f32 0.0, %v337
      %v339 = vpop.f32.mrb[0].mxu0
      %v340 = vadd.f32 0.0, %v339
      %341 = vmatprep.mubr.f32.mxu0 0.0
      %342 = vmatmul.mubr.f32.gmra.mrb[0].mxu0 %v269
      %v343 = vpop.f32.mrb[0].mxu0
      %v344 = vadd.f32 0.0, %v343
      %v345 = vpop.f32.mrb[0].mxu0
      %v346 = vadd.f32 0.0, %v345
      %347 = vdwg.mxu0
      %348 = vmatprep.subr.mxu0 %v235
      %349 = vmatpush1.msra.mxu0 %v234
      %350 = vmatprep.subr.mxu0 %v243
      %351 = vmatpush1.msra.mxu0 %v242
      %352 = vmatprep.subr.mxu0 %v251
      %353 = vmatpush1.msra.mxu0 %v250
      %354 = vmatprep.subr.mxu0 %v259
      %355 = vmatpush1.msra.mxu0 %v258
      %356 = vmatprep.subr.mxu0 0.0
      %357 = vmatpush1.msra.mxu0 0.0
      %358 = vmatprep.subr.mxu0 0.0
      %359 = vmatpush1.msra.mxu0 0.0
      %360 = vmatprep.subr.mxu0 0.0
      %361 = vmatpush1.msra.mxu0 0.0
      %362 = vmatprep.subr.mxu0 0.0
      %363 = vmatpush1.msra.mxu0 0.0
      %364 = vmatprep.subr.mxu0 0.0
      %365 = vmatpush1.msra.mxu0 0.0
      %366 = vmatprep.subr.mxu0 0.0
      %367 = vmatpush1.msra.mxu0 0.0
      %368 = vmatprep.subr.mxu0 0.0
      %369 = vmatpush1.msra.mxu0 0.0
      %370 = vmatprep.subr.mxu0 0.0
      %371 = vmatpush1.msra.mxu0 0.0
      %372 = vmatprep.subr.mxu0 0.0
      %373 = vmatpush1.msra.mxu0 0.0
      %374 = vmatprep.subr.mxu0 0.0
      %375 = vmatpush1.msra.mxu0 0.0
      %376 = vmatprep.subr.mxu0 0.0
      %377 = vmatpush1.msra.mxu0 0.0
      %378 = vmatprep.subr.mxu0 0.0
      %379 = vmatpush1.msra.mxu0 0.0
      %380 = vmatprep.subr.mxu0 0.0
      %381 = vmatpush1.msra.mxu0 0.0
      %382 = vmatprep.subr.mxu0 0.0
      %383 = vmatpush1.msra.mxu0 0.0
      %384 = vmatprep.subr.mxu0 0.0
      %385 = vmatpush1.msra.mxu0 0.0
      %386 = vmatprep.subr.mxu0 0.0
      %387 = vmatpush1.msra.mxu0 0.0
      %388 = vmatprep.subr.mxu0 0.0
      %389 = vmatpush1.msra.mxu0 0.0
      %390 = vmatprep.subr.mxu0 0.0
      %391 = vmatpush1.msra.mxu0 0.0
      %392 = vmatprep.subr.mxu0 0.0
      %393 = vmatpush1.msra.mxu0 0.0
      %394 = vmatprep.subr.mxu0 0.0
      %395 = vmatpush1.msra.mxu0 0.0
      %396 = vmatprep.subr.mxu0 0.0
      %397 = vmatpush1.msra.mxu0 0.0
      %398 = vmatprep.subr.mxu0 0.0
      %399 = vmatpush1.msra.mxu0 0.0
      %400 = vmatprep.subr.mxu0 0.0
      %401 = vmatpush1.msra.mxu0 0.0
      %402 = vmatprep.subr.mxu0 0.0
      %403 = vmatpush1.msra.mxu0 0.0
      %404 = vmatprep.subr.mxu0 0.0
      %405 = vmatpush1.msra.mxu0 0.0
      %406 = vmatprep.subr.mxu0 0.0
      %407 = vmatpush1.msra.mxu0 0.0
      %408 = vmatprep.subr.mxu0 0.0
      %409 = vmatpush1.msra.mxu0 0.0
      %410 = vmatprep.subr.mxu0 0.0
      %411 = vmatpush1.msra.mxu0 0.0
      %412 = vmatprep.mubr.f32.mxu0 0.0
      %413 = vmatmul.mubr.f32.gmra.mrb[0].mxu0 %v266
      %v414 = vpop.f32.mrb[0].mxu0
      %v415 = vadd.f32 0.0, %v414
      %v416 = vpop.f32.mrb[0].mxu0
      %v417 = vadd.f32 0.0, %v416
      %418 = vmatprep.mubr.f32.mxu0 0.0
      %419 = vmatmul.mubr.f32.gmra.mrb[0].mxu0 %v269
      %v420 = vpop.f32.mrb[0].mxu0
      %v421 = vadd.f32 0.0, %v420
      %v422 = vpop.f32.mrb[0].mxu0
      %v423 = vadd.f32 0.0, %v422
      %424 = vdwg.mxu0
      %425 = vmatprep.subr.mxu0 %v237
      %426 = vmatpush1.msra.mxu0 %v236
      %427 = vmatprep.subr.mxu0 %v245
      %428 = vmatpush1.msra.mxu0 %v244
      %429 = vmatprep.subr.mxu0 %v253
      %430 = vmatpush1.msra.mxu0 %v252
      %431 = vmatprep.subr.mxu0 %v261
      %432 = vmatpush1.msra.mxu0 %v260
      %433 = vmatprep.subr.mxu0 0.0
      %434 = vmatpush1.msra.mxu0 0.0
      %435 = vmatprep.subr.mxu0 0.0
      %436 = vmatpush1.msra.mxu0 0.0
      %437 = vmatprep.subr.mxu0 0.0
      %438 = vmatpush1.msra.mxu0 0.0
      %439 = vmatprep.subr.mxu0 0.0
      %440 = vmatpush1.msra.mxu0 0.0
      %441 = vmatprep.subr.mxu0 0.0
      %442 = vmatpush1.msra.mxu0 0.0
      %443 = vmatprep.subr.mxu0 0.0
      %444 = vmatpush1.msra.mxu0 0.0
      %445 = vmatprep.subr.mxu0 0.0
      %446 = vmatpush1.msra.mxu0 0.0
      %447 = vmatprep.subr.mxu0 0.0
      %448 = vmatpush1.msra.mxu0 0.0
      %449 = vmatprep.subr.mxu0 0.0
      %450 = vmatpush1.msra.mxu0 0.0
      %451 = vmatprep.subr.mxu0 0.0
      %452 = vmatpush1.msra.mxu0 0.0
      %453 = vmatprep.subr.mxu0 0.0
      %454 = vmatpush1.msra.mxu0 0.0
      %455 = vmatprep.subr.mxu0 0.0
      %456 = vmatpush1.msra.mxu0 0.0
      %457 = vmatprep.subr.mxu0 0.0
      %458 = vmatpush1.msra.mxu0 0.0
      %459 = vmatprep.subr.mxu0 0.0
      %460 = vmatpush1.msra.mxu0 0.0
      %461 = vmatprep.subr.mxu0 0.0
      %462 = vmatpush1.msra.mxu0 0.0
      %463 = vmatprep.subr.mxu0 0.0
      %464 = vmatpush1.msra.mxu0 0.0
      %465 = vmatprep.subr.mxu0 0.0
      %466 = vmatpush1.msra.mxu0 0.0
      %467 = vmatprep.subr.mxu0 0.0
      %468 = vmatpush1.msra.mxu0 0.0
      %469 = vmatprep.subr.mxu0 0.0
      %470 = vmatpush1.msra.mxu0 0.0
      %471 = vmatprep.subr.mxu0 0.0
      %472 = vmatpush1.msra.mxu0 0.0
      %473 = vmatprep.subr.mxu0 0.0
      %474 = vmatpush1.msra.mxu0 0.0
      %475 = vmatprep.subr.mxu0 0.0
      %476 = vmatpush1.msra.mxu0 0.0
      %477 = vmatprep.subr.mxu0 0.0
      %478 = vmatpush1.msra.mxu0 0.0
      %479 = vmatprep.subr.mxu0 0.0
      %480 = vmatpush1.msra.mxu0 0.0
      %481 = vmatprep.subr.mxu0 0.0
      %482 = vmatpush1.msra.mxu0 0.0
      %483 = vmatprep.subr.mxu0 0.0
      %484 = vmatpush1.msra.mxu0 0.0
      %485 = vmatprep.subr.mxu0 0.0
      %486 = vmatpush1.msra.mxu0 0.0
      %487 = vmatprep.subr.mxu0 0.0
      %488 = vmatpush1.msra.mxu0 0.0
      %489 = vmatprep.mubr.f32.mxu0 0.0
      %490 = vmatmul.mubr.f32.gmra.mrb[0].mxu0 %v266
      %v491 = vpop.f32.mrb[0].mxu0
      %v492 = vadd.f32 0.0, %v491
      %v493 = vpop.f32.mrb[0].mxu0
      %v494 = vadd.f32 0.0, %v493
      %495 = vmatprep.mubr.f32.mxu0 0.0
      %496 = vmatmul.mubr.f32.gmra.mrb[0].mxu0 %v269
      %v497 = vpop.f32.mrb[0].mxu0
      %v498 = vadd.f32 0.0, %v497
      %v499 = vpop.f32.mrb[0].mxu0
      %v500 = vadd.f32 0.0, %v499
      %501 = vdwg.mxu0
      %502 = vmatprep.subr.mxu0 %v239
      %503 = vmatpush1.msra.mxu0 %v238
      %504 = vmatprep.subr.mxu0 %v247
      %505 = vmatpush1.msra.mxu0 %v246
      %506 = vmatprep.subr.mxu0 %v255
      %507 = vmatpush1.msra.mxu0 %v254
      %508 = vmatprep.subr.mxu0 %v263
      %509 = vmatpush1.msra.mxu0 %v262
      %510 = vmatprep.subr.mxu0 0.0
      %511 = vmatpush1.msra.mxu0 0.0
      %512 = vmatprep.subr.mxu0 0.0
      %513 = vmatpush1.msra.mxu0 0.0
      %514 = vmatprep.subr.mxu0 0.0
      %515 = vmatpush1.msra.mxu0 0.0
      %516 = vmatprep.subr.mxu0 0.0
      %517 = vmatpush1.msra.mxu0 0.0
      %518 = vmatprep.subr.mxu0 0.0
      %519 = vmatpush1.msra.mxu0 0.0
      %520 = vmatprep.subr.mxu0 0.0
      %521 = vmatpush1.msra.mxu0 0.0
      %522 = vmatprep.subr.mxu0 0.0
      %523 = vmatpush1.msra.mxu0 0.0
      %524 = vmatprep.subr.mxu0 0.0
      %525 = vmatpush1.msra.mxu0 0.0
      %526 = vmatprep.subr.mxu0 0.0
      %527 = vmatpush1.msra.mxu0 0.0
      %528 = vmatprep.subr.mxu0 0.0
      %529 = vmatpush1.msra.mxu0 0.0
      %530 = vmatprep.subr.mxu0 0.0
      %531 = vmatpush1.msra.mxu0 0.0
      %532 = vmatprep.subr.mxu0 0.0
      %533 = vmatpush1.msra.mxu0 0.0
      %534 = vmatprep.subr.mxu0 0.0
      %535 = vmatpush1.msra.mxu0 0.0
      %536 = vmatprep.subr.mxu0 0.0
      %537 = vmatpush1.msra.mxu0 0.0
      %538 = vmatprep.subr.mxu0 0.0
      %539 = vmatpush1.msra.mxu0 0.0
      %540 = vmatprep.subr.mxu0 0.0
      %541 = vmatpush1.msra.mxu0 0.0
      %542 = vmatprep.subr.mxu0 0.0
      %543 = vmatpush1.msra.mxu0 0.0
      %544 = vmatprep.subr.mxu0 0.0
      %545 = vmatpush1.msra.mxu0 0.0
      %546 = vmatprep.subr.mxu0 0.0
      %547 = vmatpush1.msra.mxu0 0.0
      %548 = vmatprep.subr.mxu0 0.0
      %549 = vmatpush1.msra.mxu0 0.0
      %550 = vmatprep.subr.mxu0 0.0
      %551 = vmatpush1.msra.mxu0 0.0
      %552 = vmatprep.subr.mxu0 0.0
      %553 = vmatpush1.msra.mxu0 0.0
      %554 = vmatprep.subr.mxu0 0.0
      %555 = vmatpush1.msra.mxu0 0.0
      %556 = vmatprep.subr.mxu0 0.0
      %557 = vmatpush1.msra.mxu0 0.0
      %558 = vmatprep.subr.mxu0 0.0
      %559 = vmatpush1.msra.mxu0 0.0
      %560 = vmatprep.subr.mxu0 0.0
      %561 = vmatpush1.msra.mxu0 0.0
      %562 = vmatprep.subr.mxu0 0.0
      %563 = vmatpush1.msra.mxu0 0.0
      %564 = vmatprep.subr.mxu0 0.0
      %565 = vmatpush1.msra.mxu0 0.0
      %566 = vmatprep.mubr.f32.mxu0 0.0
      %567 = vmatmul.mubr.f32.gmra.mrb[0].mxu0 %v266
      %v568 = vpop.f32.mrb[0].mxu0
      %v569 = vadd.f32 0.0, %v568
      %v570 = vpop.f32.mrb[0].mxu0
      %v571 = vadd.f32 0.0, %v570
      %572 = vmatprep.mubr.f32.mxu0 0.0
      %573 = vmatmul.mubr.f32.gmra.mrb[0].mxu0 %v269
      %v574 = vpop.f32.mrb[0].mxu0
      %v575 = vadd.f32 0.0, %v574
      %v576 = vpop.f32.mrb[0].mxu0
      %v577 = vadd.f32 0.0, %v576
      %578 = vdwg.mxu0
      %v579 = vmul.f32 %v338, %v338
      %v580 = vmul.f32 %v340, %v340
      %v581 = vmul.f32 %v415, %v415
      %v582 = vmul.f32 %v417, %v417
      %v583 = vmul.f32 %v492, %v492
      %v584 = vmul.f32 %v494, %v494
      %v585 = vmul.f32 %v569, %v569
      %v586 = vmul.f32 %v571, %v571
      %v587 = vmul.f32 %v344, %v344
      %v588 = vmul.f32 %v346, %v346
      %v589 = vmul.f32 %v421, %v421
      %v590 = vmul.f32 %v423, %v423
      %v591 = vmul.f32 %v498, %v498
      %v592 = vmul.f32 %v500, %v500
      %v593 = vmul.f32 %v575, %v575
      %v594 = vmul.f32 %v577, %v577
      %v595 = vld [vmem:[%s2] sm:$0xff]
      %v596 = vld [vmem:[%s2 + $0x8] sm:$0xff]
      %v597 = vld [vmem:[%s2 + $0x10] sm:$0xff]
      %v598 = vld [vmem:[%s2 + $0x18] sm:$0xff]
      %v599 = vld [vmem:[%s2 + $0x20] sm:$0xff]
      %v600 = vld [vmem:[%s2 + $0x28] sm:$0xff]
      %v601 = vld [vmem:[%s2 + $0x30] sm:$0xff]
      %v602 = vld [vmem:[%s2 + $0x38] sm:$0xff]
      %v603 = vld [vmem:[%s2 + $0x40] sm:$0xff]
      %v604 = vld [vmem:[%s2 + $0x48] sm:$0xff]
      %v605 = vld [vmem:[%s2 + $0x50] sm:$0xff]
      %v606 = vld [vmem:[%s2 + $0x58] sm:$0xff]
      %v607 = vld [vmem:[%s2 + $0x60] sm:$0xff]
      %v608 = vld [vmem:[%s2 + $0x68] sm:$0xff]
      %v609 = vld [vmem:[%s2 + $0x70] sm:$0xff]
      %v610 = vld [vmem:[%s2 + $0x78] sm:$0xff]
      %v611 = vld [vmem:[%s2 + $0x80] sm:$0xff]
      %v612 = vld [vmem:[%s2 + $0x88] sm:$0xff]
      %v613 = vld [vmem:[%s2 + $0x90] sm:$0xff]
      %v614 = vld [vmem:[%s2 + $0x98] sm:$0xff]
      %v615 = vld [vmem:[%s2 + $0xa0] sm:$0xff]
      %v616 = vld [vmem:[%s2 + $0xa8] sm:$0xff]
      %v617 = vld [vmem:[%s2 + $0xb0] sm:$0xff]
      %v618 = vld [vmem:[%s2 + $0xb8] sm:$0xff]
      %v619 = vld [vmem:[%s2 + $0xc0] sm:$0xff]
      %v620 = vld [vmem:[%s2 + $0xc8] sm:$0xff]
      %v621 = vld [vmem:[%s2 + $0xd0] sm:$0xff]
      %v622 = vld [vmem:[%s2 + $0xd8] sm:$0xff]
      %v623 = vld [vmem:[%s2 + $0xe0] sm:$0xff]
      %v624 = vld [vmem:[%s2 + $0xe8] sm:$0xff]
      %v625 = vld [vmem:[%s2 + $0xf0] sm:$0xff]
      %v626 = vld [vmem:[%s2 + $0xf8] sm:$0xff]
      %v627 = vld [vmem:[%s2 + $0x100] sm:$0xff]
      %v628 = vld [vmem:[%s2 + $0x108] sm:$0xff]
      %v629 = vld [vmem:[%s2 + $0x110] sm:$0xff]
      %v630 = vld [vmem:[%s2 + $0x118] sm:$0xff]
      %v631 = vld [vmem:[%s2 + $0x120] sm:$0xff]
      %v632 = vld [vmem:[%s2 + $0x128] sm:$0xff]
      %v633 = vld [vmem:[%s2 + $0x130] sm:$0xff]
      %v634 = vld [vmem:[%s2 + $0x138] sm:$0xff]
      %v635 = vld [vmem:[%s2 + $0x140] sm:$0xff]
      %v636 = vld [vmem:[%s2 + $0x148] sm:$0xff]
      %v637 = vld [vmem:[%s2 + $0x150] sm:$0xff]
      %v638 = vld [vmem:[%s2 + $0x158] sm:$0xff]
      %v639 = vld [vmem:[%s2 + $0x160] sm:$0xff]
      %v640 = vld [vmem:[%s2 + $0x168] sm:$0xff]
      %v641 = vld [vmem:[%s2 + $0x170] sm:$0xff]
      %v642 = vld [vmem:[%s2 + $0x178] sm:$0xff]
      %v643 = vld [vmem:[%s2 + $0x180] sm:$0xff]
      %v644 = vld [vmem:[%s2 + $0x188] sm:$0xff]
      %v645 = vld [vmem:[%s2 + $0x190] sm:$0xff]
      %v646 = vld [vmem:[%s2 + $0x198] sm:$0xff]
      %v647 = vld [vmem:[%s2 + $0x1a0] sm:$0xff]
      %v648 = vld [vmem:[%s2 + $0x1a8] sm:$0xff]
      %v649 = vld [vmem:[%s2 + $0x1b0] sm:$0xff]
      %v650 = vld [vmem:[%s2 + $0x1b8] sm:$0xff]
      %v651 = vld [vmem:[%s2 + $0x1c0] sm:$0xff]
      %v652 = vld [vmem:[%s2 + $0x1c8] sm:$0xff]
      %v653 = vld [vmem:[%s2 + $0x1d0] sm:$0xff]
      %v654 = vld [vmem:[%s2 + $0x1d8] sm:$0xff]
      %v655 = vld [vmem:[%s2 + $0x1e0] sm:$0xff]
      %v656 = vld [vmem:[%s2 + $0x1e8] sm:$0xff]
      %v657 = vld [vmem:[%s2 + $0x1f0] sm:$0xff]
      %v658 = vld [vmem:[%s2 + $0x1f8] sm:$0xff]
      %v659 = vld [vmem:[%s2 + $0x200] sm:$0xff]
      %v660 = vld [vmem:[%s2 + $0x208] sm:$0xff]
      %v661 = vld [vmem:[%s2 + $0x210] sm:$0xff]
      %v662 = vld [vmem:[%s2 + $0x218] sm:$0xff]
      %v663 = vld [vmem:[%s2 + $0x220] sm:$0xff]
      %v664 = vld [vmem:[%s2 + $0x228] sm:$0xff]
      %v665 = vld [vmem:[%s2 + $0x230] sm:$0xff]
      %v666 = vld [vmem:[%s2 + $0x238] sm:$0xff]
      %v667 = vld [vmem:[%s2 + $0x240] sm:$0xff]
      %v668 = vld [vmem:[%s2 + $0x248] sm:$0xff]
      %v669 = vld [vmem:[%s2 + $0x250] sm:$0xff]
      %v670 = vld [vmem:[%s2 + $0x258] sm:$0xff]
      %v671 = vld [vmem:[%s2 + $0x260] sm:$0xff]
      %v672 = vld [vmem:[%s2 + $0x268] sm:$0xff]
      %v673 = vld [vmem:[%s2 + $0x270] sm:$0xff]
      %v674 = vld [vmem:[%s2 + $0x278] sm:$0xff]
      %v675 = vld [vmem:[%s2 + $0x280] sm:$0xff]
      %v676 = vld [vmem:[%s2 + $0x288] sm:$0xff]
      %v677 = vld [vmem:[%s2 + $0x290] sm:$0xff]
      %v678 = vld [vmem:[%s2 + $0x298] sm:$0xff]
      %v679 = vld [vmem:[%s2 + $0x2a0] sm:$0xff]
      %v680 = vld [vmem:[%s2 + $0x2a8] sm:$0xff]
      %v681 = vld [vmem:[%s2 + $0x2b0] sm:$0xff]
      %v682 = vld [vmem:[%s2 + $0x2b8] sm:$0xff]
      %v683 = vld [vmem:[%s2 + $0x2c0] sm:$0xff]
      %v684 = vld [vmem:[%s2 + $0x2c8] sm:$0xff]
      %v685 = vld [vmem:[%s2 + $0x2d0] sm:$0xff]
      %v686 = vld [vmem:[%s2 + $0x2d8] sm:$0xff]
      %v687 = vld [vmem:[%s2 + $0x2e0] sm:$0xff]
      %v688 = vld [vmem:[%s2 + $0x2e8] sm:$0xff]
      %v689 = vld [vmem:[%s2 + $0x2f0] sm:$0xff]
      %v690 = vld [vmem:[%s2 + $0x2f8] sm:$0xff]
      %v691 = vld [vmem:[%s2 + $0x300] sm:$0xff]
      %v692 = vld [vmem:[%s2 + $0x308] sm:$0xff]
      %v693 = vld [vmem:[%s2 + $0x310] sm:$0xff]
      %v694 = vld [vmem:[%s2 + $0x318] sm:$0xff]
      %v695 = vld [vmem:[%s2 + $0x320] sm:$0xff]
      %v696 = vld [vmem:[%s2 + $0x328] sm:$0xff]
      %v697 = vld [vmem:[%s2 + $0x330] sm:$0xff]
      %v698 = vld [vmem:[%s2 + $0x338] sm:$0xff]
      %v699 = vld [vmem:[%s2 + $0x340] sm:$0xff]
      %v700 = vld [vmem:[%s2 + $0x348] sm:$0xff]
      %v701 = vld [vmem:[%s2 + $0x350] sm:$0xff]
      %v702 = vld [vmem:[%s2 + $0x358] sm:$0xff]
      %v703 = vld [vmem:[%s2 + $0x360] sm:$0xff]
      %v704 = vld [vmem:[%s2 + $0x368] sm:$0xff]
      %v705 = vld [vmem:[%s2 + $0x370] sm:$0xff]
      %v706 = vld [vmem:[%s2 + $0x378] sm:$0xff]
      %v707 = vld [vmem:[%s2 + $0x380] sm:$0xff]
      %v708 = vld [vmem:[%s2 + $0x388] sm:$0xff]
      %v709 = vld [vmem:[%s2 + $0x390] sm:$0xff]
      %v710 = vld [vmem:[%s2 + $0x398] sm:$0xff]
      %v711 = vld [vmem:[%s2 + $0x3a0] sm:$0xff]
      %v712 = vld [vmem:[%s2 + $0x3a8] sm:$0xff]
      %v713 = vld [vmem:[%s2 + $0x3b0] sm:$0xff]
      %v714 = vld [vmem:[%s2 + $0x3b8] sm:$0xff]
      %v715 = vld [vmem:[%s2 + $0x3c0] sm:$0xff]
      %v716 = vld [vmem:[%s2 + $0x3c8] sm:$0xff]
      %v717 = vld [vmem:[%s2 + $0x3d0] sm:$0xff]
      %v718 = vld [vmem:[%s2 + $0x3d8] sm:$0xff]
      %v719 = vld [vmem:[%s2 + $0x3e0] sm:$0xff]
      %v720 = vld [vmem:[%s2 + $0x3e8] sm:$0xff]
      %v721 = vld [vmem:[%s2 + $0x3f0] sm:$0xff]
      %v722 = vld [vmem:[%s2 + $0x3f8] sm:$0xff]
      %723 = vmatprep.subr.mxu0 0.0
      %724 = vmatpush1.msra.mxu0 %v595
      %725 = vmatprep.subr.mxu0 0.0
      %726 = vmatpush1.msra.mxu0 %v596
      %727 = vmatprep.subr.mxu0 0.0
      %728 = vmatpush1.msra.mxu0 %v597
      %729 = vmatprep.subr.mxu0 0.0
      %730 = vmatpush1.msra.mxu0 %v598
      %731 = vmatprep.subr.mxu0 0.0
      %732 = vmatpush1.msra.mxu0 %v599
      %733 = vmatprep.subr.mxu0 0.0
      %734 = vmatpush1.msra.mxu0 %v600
      %735 = vmatprep.subr.mxu0 0.0
      %736 = vmatpush1.msra.mxu0 %v601
      %737 = vmatprep.subr.mxu0 0.0
      %738 = vmatpush1.msra.mxu0 %v602
      %739 = vmatprep.subr.mxu0 0.0
      %740 = vmatpush1.msra.mxu0 %v603
      %741 = vmatprep.subr.mxu0 0.0
      %742 = vmatpush1.msra.mxu0 %v604
      %743 = vmatprep.subr.mxu0 0.0
      %744 = vmatpush1.msra.mxu0 %v605
      %745 = vmatprep.subr.mxu0 0.0
      %746 = vmatpush1.msra.mxu0 %v606
      %747 = vmatprep.subr.mxu0 0.0
      %748 = vmatpush1.msra.mxu0 %v607
      %749 = vmatprep.subr.mxu0 0.0
      %750 = vmatpush1.msra.mxu0 %v608
      %751 = vmatprep.subr.mxu0 0.0
      %752 = vmatpush1.msra.mxu0 %v609
      %753 = vmatprep.subr.mxu0 0.0
      %754 = vmatpush1.msra.mxu0 %v610
      %755 = vmatprep.subr.mxu0 0.0
      %756 = vmatpush1.msra.mxu0 %v611
      %757 = vmatprep.subr.mxu0 0.0
      %758 = vmatpush1.msra.mxu0 %v612
      %759 = vmatprep.subr.mxu0 0.0
      %760 = vmatpush1.msra.mxu0 %v613
      %761 = vmatprep.subr.mxu0 0.0
      %762 = vmatpush1.msra.mxu0 %v614
      %763 = vmatprep.subr.mxu0 0.0
      %764 = vmatpush1.msra.mxu0 %v615
      %765 = vmatprep.subr.mxu0 0.0
      %766 = vmatpush1.msra.mxu0 %v616
      %767 = vmatprep.subr.mxu0 0.0
      %768 = vmatpush1.msra.mxu0 %v617
      %769 = vmatprep.subr.mxu0 0.0
      %770 = vmatpush1.msra.mxu0 %v618
      %771 = vmatprep.subr.mxu0 0.0
      %772 = vmatpush1.msra.mxu0 %v619
      %773 = vmatprep.subr.mxu0 0.0
      %774 = vmatpush1.msra.mxu0 %v620
      %775 = vmatprep.subr.mxu0 0.0
      %776 = vmatpush1.msra.mxu0 %v621
      %777 = vmatprep.subr.mxu0 0.0
      %778 = vmatpush1.msra.mxu0 %v622
      %779 = vmatprep.subr.mxu0 0.0
      %780 = vmatpush1.msra.mxu0 %v623
      %781 = vmatprep.subr.mxu0 0.0
      %782 = vmatpush1.msra.mxu0 %v624
      %783 = vmatprep.subr.mxu0 0.0
      %784 = vmatpush1.msra.mxu0 %v625
      %785 = vmatprep.subr.mxu0 0.0
      %786 = vmatpush1.msra.mxu0 %v626
      %787 = vmatprep.mubr.f32.mxu0 %v580
      %788 = vmatmul.mubr.f32.gmra.mrb[0].mxu0 %v579
      %v789 = vpop.f32.mrb[0].mxu0
      %v790 = vadd.f32 1e-05, %v789
      %v791 = vpop.f32.mrb[0].mxu0
      %792 = vmatprep.mubr.f32.mxu0 %v588
      %793 = vmatmul.mubr.f32.gmra.mrb[0].mxu0 %v587
      %v794 = vpop.f32.mrb[0].mxu0
      %v795 = vadd.f32 1e-05, %v794
      %v796 = vpop.f32.mrb[0].mxu0
      %797 = vdwg.mxu0
      %798 = vmatprep.subr.mxu0 0.0
      %799 = vmatpush1.msra.mxu0 %v627
      %800 = vmatprep.subr.mxu0 0.0
      %801 = vmatpush1.msra.mxu0 %v628
      %802 = vmatprep.subr.mxu0 0.0
      %803 = vmatpush1.msra.mxu0 %v629
      %804 = vmatprep.subr.mxu0 0.0
      %805 = vmatpush1.msra.mxu0 %v630
      %806 = vmatprep.subr.mxu0 0.0
      %807 = vmatpush1.msra.mxu0 %v631
      %808 = vmatprep.subr.mxu0 0.0
      %809 = vmatpush1.msra.mxu0 %v632
      %810 = vmatprep.subr.mxu0 0.0
      %811 = vmatpush1.msra.mxu0 %v633
      %812 = vmatprep.subr.mxu0 0.0
      %813 = vmatpush1.msra.mxu0 %v634
      %814 = vmatprep.subr.mxu0 0.0
      %815 = vmatpush1.msra.mxu0 %v635
      %816 = vmatprep.subr.mxu0 0.0
      %817 = vmatpush1.msra.mxu0 %v636
      %818 = vmatprep.subr.mxu0 0.0
      %819 = vmatpush1.msra.mxu0 %v637
      %820 = vmatprep.subr.mxu0 0.0
      %821 = vmatpush1.msra.mxu0 %v638
      %822 = vmatprep.subr.mxu0 0.0
      %823 = vmatpush1.msra.mxu0 %v639
      %824 = vmatprep.subr.mxu0 0.0
      %825 = vmatpush1.msra.mxu0 %v640
      %826 = vmatprep.subr.mxu0 0.0
      %827 = vmatpush1.msra.mxu0 %v641
      %828 = vmatprep.subr.mxu0 0.0
      %829 = vmatpush1.msra.mxu0 %v642
      %830 = vmatprep.subr.mxu0 0.0
      %831 = vmatpush1.msra.mxu0 %v643
      %832 = vmatprep.subr.mxu0 0.0
      %833 = vmatpush1.msra.mxu0 %v644
      %834 = vmatprep.subr.mxu0 0.0
      %835 = vmatpush1.msra.mxu0 %v645
      %836 = vmatprep.subr.mxu0 0.0
      %837 = vmatpush1.msra.mxu0 %v646
      %838 = vmatprep.subr.mxu0 0.0
      %839 = vmatpush1.msra.mxu0 %v647
      %840 = vmatprep.subr.mxu0 0.0
      %841 = vmatpush1.msra.mxu0 %v648
      %842 = vmatprep.subr.mxu0 0.0
      %843 = vmatpush1.msra.mxu0 %v649
      %844 = vmatprep.subr.mxu0 0.0
      %845 = vmatpush1.msra.mxu0 %v650
      %846 = vmatprep.subr.mxu0 0.0
      %847 = vmatpush1.msra.mxu0 %v651
      %848 = vmatprep.subr.mxu0 0.0
      %849 = vmatpush1.msra.mxu0 %v652
      %850 = vmatprep.subr.mxu0 0.0
      %851 = vmatpush1.msra.mxu0 %v653
      %852 = vmatprep.subr.mxu0 0.0
      %853 = vmatpush1.msra.mxu0 %v654
      %854 = vmatprep.subr.mxu0 0.0
      %855 = vmatpush1.msra.mxu0 %v655
      %856 = vmatprep.subr.mxu0 0.0
      %857 = vmatpush1.msra.mxu0 %v656
      %858 = vmatprep.subr.mxu0 0.0
      %859 = vmatpush1.msra.mxu0 %v657
      %860 = vmatprep.subr.mxu0 0.0
      %861 = vmatpush1.msra.mxu0 %v658
      %862 = vmatprep.mubr.f32.mxu0 %v582
      %863 = vmatmul.mubr.f32.gmra.mrb[0].mxu0 %v581
      %v864 = vpop.f32.mrb[0].mxu0
      %v865 = vadd.f32 %v790, %v864
      %v866 = vpop.f32.mrb[0].mxu0
      %867 = vmatprep.mubr.f32.mxu0 %v590
      %868 = vmatmul.mubr.f32.gmra.mrb[0].mxu0 %v589
      %v869 = vpop.f32.mrb[0].mxu0
      %v870 = vadd.f32 %v795, %v869
      %v871 = vpop.f32.mrb[0].mxu0
      %872 = vdwg.mxu0
      %873 = vmatprep.subr.mxu0 0.0
      %874 = vmatpush1.msra.mxu0 %v659
      %875 = vmatprep.subr.mxu0 0.0
      %876 = vmatpush1.msra.mxu0 %v660
      %877 = vmatprep.subr.mxu0 0.0
      %878 = vmatpush1.msra.mxu0 %v661
      %879 = vmatprep.subr.mxu0 0.0
      %880 = vmatpush1.msra.mxu0 %v662
      %881 = vmatprep.subr.mxu0 0.0
      %882 = vmatpush1.msra.mxu0 %v663
      %883 = vmatprep.subr.mxu0 0.0
      %884 = vmatpush1.msra.mxu0 %v664
      %885 = vmatprep.subr.mxu0 0.0
      %886 = vmatpush1.msra.mxu0 %v665
      %887 = vmatprep.subr.mxu0 0.0
      %888 = vmatpush1.msra.mxu0 %v666
      %889 = vmatprep.subr.mxu0 0.0
      %890 = vmatpush1.msra.mxu0 %v667
      %891 = vmatprep.subr.mxu0 0.0
      %892 = vmatpush1.msra.mxu0 %v668
      %893 = vmatprep.subr.mxu0 0.0
      %894 = vmatpush1.msra.mxu0 %v669
      %895 = vmatprep.subr.mxu0 0.0
      %896 = vmatpush1.msra.mxu0 %v670
      %897 = vmatprep.subr.mxu0 0.0
      %898 = vmatpush1.msra.mxu0 %v671
      %899 = vmatprep.subr.mxu0 0.0
      %900 = vmatpush1.msra.mxu0 %v672
      %901 = vmatprep.subr.mxu0 0.0
      %902 = vmatpush1.msra.mxu0 %v673
      %903 = vmatprep.subr.mxu0 0.0
      %904 = vmatpush1.msra.mxu0 %v674
      %905 = vmatprep.subr.mxu0 0.0
      %906 = vmatpush1.msra.mxu0 %v675
      %907 = vmatprep.subr.mxu0 0.0
      %908 = vmatpush1.msra.mxu0 %v676
      %909 = vmatprep.subr.mxu0 0.0
      %910 = vmatpush1.msra.mxu0 %v677
      %911 = vmatprep.subr.mxu0 0.0
      %912 = vmatpush1.msra.mxu0 %v678
      %913 = vmatprep.subr.mxu0 0.0
      %914 = vmatpush1.msra.mxu0 %v679
      %915 = vmatprep.subr.mxu0 0.0
      %916 = vmatpush1.msra.mxu0 %v680
      %917 = vmatprep.subr.mxu0 0.0
      %918 = vmatpush1.msra.mxu0 %v681
      %919 = vmatprep.subr.mxu0 0.0
      %920 = vmatpush1.msra.mxu0 %v682
      %921 = vmatprep.subr.mxu0 0.0
      %922 = vmatpush1.msra.mxu0 %v683
      %923 = vmatprep.subr.mxu0 0.0
      %924 = vmatpush1.msra.mxu0 %v684
      %925 = vmatprep.subr.mxu0 0.0
      %926 = vmatpush1.msra.mxu0 %v685
      %927 = vmatprep.subr.mxu0 0.0
      %928 = vmatpush1.msra.mxu0 %v686
      %929 = vmatprep.subr.mxu0 0.0
      %930 = vmatpush1.msra.mxu0 %v687
      %931 = vmatprep.subr.mxu0 0.0
      %932 = vmatpush1.msra.mxu0 %v688
      %933 = vmatprep.subr.mxu0 0.0
      %934 = vmatpush1.msra.mxu0 %v689
      %935 = vmatprep.subr.mxu0 0.0
      %936 = vmatpush1.msra.mxu0 %v690
      %937 = vmatprep.mubr.f32.mxu0 %v584
      %938 = vmatmul.mubr.f32.gmra.mrb[0].mxu0 %v583
      %v939 = vpop.f32.mrb[0].mxu0
      %v940 = vadd.f32 %v865, %v939
      %v941 = vpop.f32.mrb[0].mxu0
      %942 = vmatprep.mubr.f32.mxu0 %v592
      %943 = vmatmul.mubr.f32.gmra.mrb[0].mxu0 %v591
      %v944 = vpop.f32.mrb[0].mxu0
      %v945 = vadd.f32 %v870, %v944
      %v946 = vpop.f32.mrb[0].mxu0
      %947 = vdwg.mxu0
      %948 = vmatprep.subr.mxu0 0.0
      %949 = vmatpush1.msra.mxu0 %v691
      %950 = vmatprep.subr.mxu0 0.0
      %951 = vmatpush1.msra.mxu0 %v692
      %952 = vmatprep.subr.mxu0 0.0
      %953 = vmatpush1.msra.mxu0 %v693
      %954 = vmatprep.subr.mxu0 0.0
      %955 = vmatpush1.msra.mxu0 %v694
      %956 = vmatprep.subr.mxu0 0.0
      %957 = vmatpush1.msra.mxu0 %v695
      %958 = vmatprep.subr.mxu0 0.0
      %959 = vmatpush1.msra.mxu0 %v696
      %960 = vmatprep.subr.mxu0 0.0
      %961 = vmatpush1.msra.mxu0 %v697
      %962 = vmatprep.subr.mxu0 0.0
      %963 = vmatpush1.msra.mxu0 %v698
      %964 = vmatprep.subr.mxu0 0.0
      %965 = vmatpush1.msra.mxu0 %v699
      %966 = vmatprep.subr.mxu0 0.0
      %967 = vmatpush1.msra.mxu0 %v700
      %968 = vmatprep.subr.mxu0 0.0
      %969 = vmatpush1.msra.mxu0 %v701
      %970 = vmatprep.subr.mxu0 0.0
      %971 = vmatpush1.msra.mxu0 %v702
      %972 = vmatprep.subr.mxu0 0.0
      %973 = vmatpush1.msra.mxu0 %v703
      %974 = vmatprep.subr.mxu0 0.0
      %975 = vmatpush1.msra.mxu0 %v704
      %976 = vmatprep.subr.mxu0 0.0
      %977 = vmatpush1.msra.mxu0 %v705
      %978 = vmatprep.subr.mxu0 0.0
      %979 = vmatpush1.msra.mxu0 %v706
      %980 = vmatprep.subr.mxu0 0.0
      %981 = vmatpush1.msra.mxu0 %v707
      %982 = vmatprep.subr.mxu0 0.0
      %983 = vmatpush1.msra.mxu0 %v708
      %984 = vmatprep.subr.mxu0 0.0
      %985 = vmatpush1.msra.mxu0 %v709
      %986 = vmatprep.subr.mxu0 0.0
      %987 = vmatpush1.msra.mxu0 %v710
      %988 = vmatprep.subr.mxu0 0.0
      %989 = vmatpush1.msra.mxu0 %v711
      %990 = vmatprep.subr.mxu0 0.0
      %991 = vmatpush1.msra.mxu0 %v712
      %992 = vmatprep.subr.mxu0 0.0
      %993 = vmatpush1.msra.mxu0 %v713
      %994 = vmatprep.subr.mxu0 0.0
      %995 = vmatpush1.msra.mxu0 %v714
      %996 = vmatprep.subr.mxu0 0.0
      %997 = vmatpush1.msra.mxu0 %v715
      %998 = vmatprep.subr.mxu0 0.0
      %999 = vmatpush1.msra.mxu0 %v716
      %1000 = vmatprep.subr.mxu0 0.0
      %1001 = vmatpush1.msra.mxu0 %v717
      %1002 = vmatprep.subr.mxu0 0.0
      %1003 = vmatpush1.msra.mxu0 %v718
      %1004 = vmatprep.subr.mxu0 0.0
      %1005 = vmatpush1.msra.mxu0 %v719
      %1006 = vmatprep.subr.mxu0 0.0
      %1007 = vmatpush1.msra.mxu0 %v720
      %1008 = vmatprep.subr.mxu0 0.0
      %1009 = vmatpush1.msra.mxu0 %v721
      %1010 = vmatprep.subr.mxu0 0.0
      %1011 = vmatpush1.msra.mxu0 %v722
      %1012 = vmatprep.mubr.f32.mxu0 %v586
      %1013 = vmatmul.mubr.f32.gmra.mrb[0].mxu0 %v585
      %v1014 = vpop.f32.mrb[0].mxu0
      %v1015 = vadd.f32 %v940, %v1014
      %v1016 = vpop.f32.mrb[0].mxu0
      %1017 = vmatprep.mubr.f32.mxu0 %v594
      %1018 = vmatmul.mubr.f32.gmra.mrb[0].mxu0 %v593
      %v1019 = vpop.f32.mrb[0].mxu0
      %v1020 = vadd.f32 %v945, %v1019
      %v1021 = vpop.f32.mrb[0].mxu0
      %1022 = vdwg.mxu0
      %v1023 = vrsqrt.pop %v1015
      %v1024 = vrsqrt.pop %v1020
      %v1025 = vld [vmem:[%s3] sm:$0xff]
      %v1026 = vld [vmem:[%s3 + $0x8] sm:$0xff]
      %v1027 = vld [vmem:[%s3 + $0x10] sm:$0xff]
      %v1028 = vld [vmem:[%s3 + $0x18] sm:$0xff]
      %v1029 = vld [vmem:[%s3 + $0x20] sm:$0xff]
      %v1030 = vld [vmem:[%s3 + $0x28] sm:$0xff]
      %v1031 = vld [vmem:[%s3 + $0x30] sm:$0xff]
      %v1032 = vld [vmem:[%s3 + $0x38] sm:$0xff]
      %v1033 = vld [vmem:[%s3 + $0x40] sm:$0xff]
      %v1034 = vld [vmem:[%s3 + $0x48] sm:$0xff]
      %v1035 = vld [vmem:[%s3 + $0x50] sm:$0xff]
      %v1036 = vld [vmem:[%s3 + $0x58] sm:$0xff]
      %v1037 = vld [vmem:[%s3 + $0x60] sm:$0xff]
      %v1038 = vld [vmem:[%s3 + $0x68] sm:$0xff]
      %v1039 = vld [vmem:[%s3 + $0x70] sm:$0xff]
      %v1040 = vld [vmem:[%s3 + $0x78] sm:$0xff]
      %v1041 = vld [vmem:[%s3 + $0x80] sm:$0xff]
      %v1042 = vld [vmem:[%s3 + $0x88] sm:$0xff]
      %v1043 = vld [vmem:[%s3 + $0x90] sm:$0xff]
      %v1044 = vld [vmem:[%s3 + $0x98] sm:$0xff]
      %v1045 = vld [vmem:[%s3 + $0xa0] sm:$0xff]
      %v1046 = vld [vmem:[%s3 + $0xa8] sm:$0xff]
      %v1047 = vld [vmem:[%s3 + $0xb0] sm:$0xff]
      %v1048 = vld [vmem:[%s3 + $0xb8] sm:$0xff]
      %v1049 = vld [vmem:[%s3 + $0xc0] sm:$0xff]
      %v1050 = vld [vmem:[%s3 + $0xc8] sm:$0xff]
      %v1051 = vld [vmem:[%s3 + $0xd0] sm:$0xff]
      %v1052 = vld [vmem:[%s3 + $0xd8] sm:$0xff]
      %v1053 = vld [vmem:[%s3 + $0xe0] sm:$0xff]
      %v1054 = vld [vmem:[%s3 + $0xe8] sm:$0xff]
      %v1055 = vld [vmem:[%s3 + $0xf0] sm:$0xff]
      %v1056 = vld [vmem:[%s3 + $0xf8] sm:$0xff]
      %v1058 = vsel %vm264, %v1023, 0
      %v1061 = vsel %vm264, %v1024, 0
      %1063 = vmatprep.subr.mxu0 %v1026
      %1064 = vmatpush1.msra.mxu0 %v1025
      %1065 = vmatprep.subr.mxu0 %v1034
      %1066 = vmatpush1.msra.mxu0 %v1033
      %1067 = vmatprep.subr.mxu0 %v1042
      %1068 = vmatpush1.msra.mxu0 %v1041
      %1069 = vmatprep.subr.mxu0 %v1050
      %1070 = vmatpush1.msra.mxu0 %v1049
      %1071 = vmatprep.subr.mxu0 0.0
      %1072 = vmatpush1.msra.mxu0 0.0
      %1073 = vmatprep.subr.mxu0 0.0
      %1074 = vmatpush1.msra.mxu0 0.0
      %1075 = vmatprep.subr.mxu0 0.0
      %1076 = vmatpush1.msra.mxu0 0.0
      %1077 = vmatprep.subr.mxu0 0.0
      %1078 = vmatpush1.msra.mxu0 0.0
      %1079 = vmatprep.subr.mxu0 0.0
      %1080 = vmatpush1.msra.mxu0 0.0
      %1081 = vmatprep.subr.mxu0 0.0
      %1082 = vmatpush1.msra.mxu0 0.0
      %1083 = vmatprep.subr.mxu0 0.0
      %1084 = vmatpush1.msra.mxu0 0.0
      %1085 = vmatprep.subr.mxu0 0.0
      %1086 = vmatpush1.msra.mxu0 0.0
      %1087 = vmatprep.subr.mxu0 0.0
      %1088 = vmatpush1.msra.mxu0 0.0
      %1089 = vmatprep.subr.mxu0 0.0
      %1090 = vmatpush1.msra.mxu0 0.0
      %1091 = vmatprep.subr.mxu0 0.0
      %1092 = vmatpush1.msra.mxu0 0.0
      %1093 = vmatprep.subr.mxu0 0.0
      %1094 = vmatpush1.msra.mxu0 0.0
      %1095 = vmatprep.subr.mxu0 0.0
      %1096 = vmatpush1.msra.mxu0 0.0
      %1097 = vmatprep.subr.mxu0 0.0
      %1098 = vmatpush1.msra.mxu0 0.0
      %1099 = vmatprep.subr.mxu0 0.0
      %1100 = vmatpush1.msra.mxu0 0.0
      %1101 = vmatprep.subr.mxu0 0.0
      %1102 = vmatpush1.msra.mxu0 0.0
      %1103 = vmatprep.subr.mxu0 0.0
      %1104 = vmatpush1.msra.mxu0 0.0
      %1105 = vmatprep.subr.mxu0 0.0
      %1106 = vmatpush1.msra.mxu0 0.0
      %1107 = vmatprep.subr.mxu0 0.0
      %1108 = vmatpush1.msra.mxu0 0.0
      %1109 = vmatprep.subr.mxu0 0.0
      %1110 = vmatpush1.msra.mxu0 0.0
      %1111 = vmatprep.subr.mxu0 0.0
      %1112 = vmatpush1.msra.mxu0 0.0
      %1113 = vmatprep.subr.mxu0 0.0
      %1114 = vmatpush1.msra.mxu0 0.0
      %1115 = vmatprep.subr.mxu0 0.0
      %1116 = vmatpush1.msra.mxu0 0.0
      %1117 = vmatprep.subr.mxu0 0.0
      %1118 = vmatpush1.msra.mxu0 0.0
      %1119 = vmatprep.subr.mxu0 0.0
      %1120 = vmatpush1.msra.mxu0 0.0
      %1121 = vmatprep.subr.mxu0 0.0
      %1122 = vmatpush1.msra.mxu0 0.0
      %1123 = vmatprep.subr.mxu0 0.0
      %1124 = vmatpush1.msra.mxu0 0.0
      %1125 = vmatprep.subr.mxu0 0.0
      %1126 = vmatpush1.msra.mxu0 0.0
      %1127 = vmatprep.mubr.f32.mxu0 0.0
      %1128 = vmatmul.mubr.f32.gmra.mrb[0].mxu0 %v1058
      %v1129 = vpop.f32.mrb[0].mxu0
      %v1130 = vadd.f32 0.0, %v1129
      %v1131 = vpop.f32.mrb[0].mxu0
      %v1132 = vadd.f32 0.0, %v1131
      %1133 = vmatprep.mubr.f32.mxu0 0.0
      %1134 = vmatmul.mubr.f32.gmra.mrb[0].mxu0 %v1061
      %v1135 = vpop.f32.mrb[0].mxu0
      %v1136 = vadd.f32 0.0, %v1135
      %v1137 = vpop.f32.mrb[0].mxu0
      %v1138 = vadd.f32 0.0, %v1137
      %1139 = vdwg.mxu0
      %1140 = vmatprep.subr.mxu0 %v1028
      %1141 = vmatpush1.msra.mxu0 %v1027
      %1142 = vmatprep.subr.mxu0 %v1036
      %1143 = vmatpush1.msra.mxu0 %v1035
      %1144 = vmatprep.subr.mxu0 %v1044
      %1145 = vmatpush1.msra.mxu0 %v1043
      %1146 = vmatprep.subr.mxu0 %v1052
      %1147 = vmatpush1.msra.mxu0 %v1051
      %1148 = vmatprep.subr.mxu0 0.0
      %1149 = vmatpush1.msra.mxu0 0.0
      %1150 = vmatprep.subr.mxu0 0.0
      %1151 = vmatpush1.msra.mxu0 0.0
      %1152 = vmatprep.subr.mxu0 0.0
      %1153 = vmatpush1.msra.mxu0 0.0
      %1154 = vmatprep.subr.mxu0 0.0
      %1155 = vmatpush1.msra.mxu0 0.0
      %1156 = vmatprep.subr.mxu0 0.0
      %1157 = vmatpush1.msra.mxu0 0.0
      %1158 = vmatprep.subr.mxu0 0.0
      %1159 = vmatpush1.msra.mxu0 0.0
      %1160 = vmatprep.subr.mxu0 0.0
      %1161 = vmatpush1.msra.mxu0 0.0
      %1162 = vmatprep.subr.mxu0 0.0
      %1163 = vmatpush1.msra.mxu0 0.0
      %1164 = vmatprep.subr.mxu0 0.0
      %1165 = vmatpush1.msra.mxu0 0.0
      %1166 = vmatprep.subr.mxu0 0.0
      %1167 = vmatpush1.msra.mxu0 0.0
      %1168 = vmatprep.subr.mxu0 0.0
      %1169 = vmatpush1.msra.mxu0 0.0
      %1170 = vmatprep.subr.mxu0 0.0
      %1171 = vmatpush1.msra.mxu0 0.0
      %1172 = vmatprep.subr.mxu0 0.0
      %1173 = vmatpush1.msra.mxu0 0.0
      %1174 = vmatprep.subr.mxu0 0.0
      %1175 = vmatpush1.msra.mxu0 0.0
      %1176 = vmatprep.subr.mxu0 0.0
      %1177 = vmatpush1.msra.mxu0 0.0
      %1178 = vmatprep.subr.mxu0 0.0
      %1179 = vmatpush1.msra.mxu0 0.0
      %1180 = vmatprep.subr.mxu0 0.0
      %1181 = vmatpush1.msra.mxu0 0.0
      %1182 = vmatprep.subr.mxu0 0.0
      %1183 = vmatpush1.msra.mxu0 0.0
      %1184 = vmatprep.subr.mxu0 0.0
      %1185 = vmatpush1.msra.mxu0 0.0
      %1186 = vmatprep.subr.mxu0 0.0
      %1187 = vmatpush1.msra.mxu0 0.0
      %1188 = vmatprep.subr.mxu0 0.0
      %1189 = vmatpush1.msra.mxu0 0.0
      %1190 = vmatprep.subr.mxu0 0.0
      %1191 = vmatpush1.msra.mxu0 0.0
      %1192 = vmatprep.subr.mxu0 0.0
      %1193 = vmatpush1.msra.mxu0 0.0
      %1194 = vmatprep.subr.mxu0 0.0
      %1195 = vmatpush1.msra.mxu0 0.0
      %1196 = vmatprep.subr.mxu0 0.0
      %1197 = vmatpush1.msra.mxu0 0.0
      %1198 = vmatprep.subr.mxu0 0.0
      %1199 = vmatpush1.msra.mxu0 0.0
      %1200 = vmatprep.subr.mxu0 0.0
      %1201 = vmatpush1.msra.mxu0 0.0
      %1202 = vmatprep.subr.mxu0 0.0
      %1203 = vmatpush1.msra.mxu0 0.0
      %1204 = vmatprep.mubr.f32.mxu0 0.0
      %1205 = vmatmul.mubr.f32.gmra.mrb[0].mxu0 %v1058
      %v1206 = vpop.f32.mrb[0].mxu0
      %v1207 = vadd.f32 0.0, %v1206
      %v1208 = vpop.f32.mrb[0].mxu0
      %v1209 = vadd.f32 0.0, %v1208
      %1210 = vmatprep.mubr.f32.mxu0 0.0
      %1211 = vmatmul.mubr.f32.gmra.mrb[0].mxu0 %v1061
      %v1212 = vpop.f32.mrb[0].mxu0
      %v1213 = vadd.f32 0.0, %v1212
      %v1214 = vpop.f32.mrb[0].mxu0
      %v1215 = vadd.f32 0.0, %v1214
      %1216 = vdwg.mxu0
      %1217 = vmatprep.subr.mxu0 %v1030
      %1218 = vmatpush1.msra.mxu0 %v1029
      %1219 = vmatprep.subr.mxu0 %v1038
      %1220 = vmatpush1.msra.mxu0 %v1037
      %1221 = vmatprep.subr.mxu0 %v1046
      %1222 = vmatpush1.msra.mxu0 %v1045
      %1223 = vmatprep.subr.mxu0 %v1054
      %1224 = vmatpush1.msra.mxu0 %v1053
      %1225 = vmatprep.subr.mxu0 0.0
      %1226 = vmatpush1.msra.mxu0 0.0
      %1227 = vmatprep.subr.mxu0 0.0
      %1228 = vmatpush1.msra.mxu0 0.0
      %1229 = vmatprep.subr.mxu0 0.0
      %1230 = vmatpush1.msra.mxu0 0.0
      %1231 = vmatprep.subr.mxu0 0.0
      %1232 = vmatpush1.msra.mxu0 0.0
      %1233 = vmatprep.subr.mxu0 0.0
      %1234 = vmatpush1.msra.mxu0 0.0
      %1235 = vmatprep.subr.mxu0 0.0
      %1236 = vmatpush1.msra.mxu0 0.0
      %1237 = vmatprep.subr.mxu0 0.0
      %1238 = vmatpush1.msra.mxu0 0.0
      %1239 = vmatprep.subr.mxu0 0.0
      %1240 = vmatpush1.msra.mxu0 0.0
      %1241 = vmatprep.subr.mxu0 0.0
      %1242 = vmatpush1.msra.mxu0 0.0
      %1243 = vmatprep.subr.mxu0 0.0
      %1244 = vmatpush1.msra.mxu0 0.0
      %1245 = vmatprep.subr.mxu0 0.0
      %1246 = vmatpush1.msra.mxu0 0.0
      %1247 = vmatprep.subr.mxu0 0.0
      %1248 = vmatpush1.msra.mxu0 0.0
      %1249 = vmatprep.subr.mxu0 0.0
      %1250 = vmatpush1.msra.mxu0 0.0
      %1251 = vmatprep.subr.mxu0 0.0
      %1252 = vmatpush1.msra.mxu0 0.0
      %1253 = vmatprep.subr.mxu0 0.0
      %1254 = vmatpush1.msra.mxu0 0.0
      %1255 = vmatprep.subr.mxu0 0.0
      %1256 = vmatpush1.msra.mxu0 0.0
      %1257 = vmatprep.subr.mxu0 0.0
      %1258 = vmatpush1.msra.mxu0 0.0
      %1259 = vmatprep.subr.mxu0 0.0
      %1260 = vmatpush1.msra.mxu0 0.0
      %1261 = vmatprep.subr.mxu0 0.0
      %1262 = vmatpush1.msra.mxu0 0.0
      %1263 = vmatprep.subr.mxu0 0.0
      %1264 = vmatpush1.msra.mxu0 0.0
      %1265 = vmatprep.subr.mxu0 0.0
      %1266 = vmatpush1.msra.mxu0 0.0
      %1267 = vmatprep.subr.mxu0 0.0
      %1268 = vmatpush1.msra.mxu0 0.0
      %1269 = vmatprep.subr.mxu0 0.0
      %1270 = vmatpush1.msra.mxu0 0.0
      %1271 = vmatprep.subr.mxu0 0.0
      %1272 = vmatpush1.msra.mxu0 0.0
      %1273 = vmatprep.subr.mxu0 0.0
      %1274 = vmatpush1.msra.mxu0 0.0
      %1275 = vmatprep.subr.mxu0 0.0
      %1276 = vmatpush1.msra.mxu0 0.0
      %1277 = vmatprep.subr.mxu0 0.0
      %1278 = vmatpush1.msra.mxu0 0.0
      %1279 = vmatprep.subr.mxu0 0.0
      %1280 = vmatpush1.msra.mxu0 0.0
      %1281 = vmatprep.mubr.f32.mxu0 0.0
      %1282 = vmatmul.mubr.f32.gmra.mrb[0].mxu0 %v1058
      %v1283 = vpop.f32.mrb[0].mxu0
      %v1284 = vadd.f32 0.0, %v1283
      %v1285 = vpop.f32.mrb[0].mxu0
      %v1286 = vadd.f32 0.0, %v1285
      %1287 = vmatprep.mubr.f32.mxu0 0.0
      %1288 = vmatmul.mubr.f32.gmra.mrb[0].mxu0 %v1061
      %v1289 = vpop.f32.mrb[0].mxu0
      %v1290 = vadd.f32 0.0, %v1289
      %v1291 = vpop.f32.mrb[0].mxu0
      %v1292 = vadd.f32 0.0, %v1291
      %1293 = vdwg.mxu0
      %1294 = vmatprep.subr.mxu0 %v1032
      %1295 = vmatpush1.msra.mxu0 %v1031
      %1296 = vmatprep.subr.mxu0 %v1040
      %1297 = vmatpush1.msra.mxu0 %v1039
      %1298 = vmatprep.subr.mxu0 %v1048
      %1299 = vmatpush1.msra.mxu0 %v1047
      %1300 = vmatprep.subr.mxu0 %v1056
      %1301 = vmatpush1.msra.mxu0 %v1055
      %1302 = vmatprep.subr.mxu0 0.0
      %1303 = vmatpush1.msra.mxu0 0.0
      %1304 = vmatprep.subr.mxu0 0.0
      %1305 = vmatpush1.msra.mxu0 0.0
      %1306 = vmatprep.subr.mxu0 0.0
      %1307 = vmatpush1.msra.mxu0 0.0
      %1308 = vmatprep.subr.mxu0 0.0
      %1309 = vmatpush1.msra.mxu0 0.0
      %1310 = vmatprep.subr.mxu0 0.0
      %1311 = vmatpush1.msra.mxu0 0.0
      %1312 = vmatprep.subr.mxu0 0.0
      %1313 = vmatpush1.msra.mxu0 0.0
      %1314 = vmatprep.subr.mxu0 0.0
      %1315 = vmatpush1.msra.mxu0 0.0
      %1316 = vmatprep.subr.mxu0 0.0
      %1317 = vmatpush1.msra.mxu0 0.0
      %1318 = vmatprep.subr.mxu0 0.0
      %1319 = vmatpush1.msra.mxu0 0.0
      %1320 = vmatprep.subr.mxu0 0.0
      %1321 = vmatpush1.msra.mxu0 0.0
      %1322 = vmatprep.subr.mxu0 0.0
      %1323 = vmatpush1.msra.mxu0 0.0
      %1324 = vmatprep.subr.mxu0 0.0
      %1325 = vmatpush1.msra.mxu0 0.0
      %1326 = vmatprep.subr.mxu0 0.0
      %1327 = vmatpush1.msra.mxu0 0.0
      %1328 = vmatprep.subr.mxu0 0.0
      %1329 = vmatpush1.msra.mxu0 0.0
      %1330 = vmatprep.subr.mxu0 0.0
      %1331 = vmatpush1.msra.mxu0 0.0
      %1332 = vmatprep.subr.mxu0 0.0
      %1333 = vmatpush1.msra.mxu0 0.0
      %1334 = vmatprep.subr.mxu0 0.0
      %1335 = vmatpush1.msra.mxu0 0.0
      %1336 = vmatprep.subr.mxu0 0.0
      %1337 = vmatpush1.msra.mxu0 0.0
      %1338 = vmatprep.subr.mxu0 0.0
      %1339 = vmatpush1.msra.mxu0 0.0
      %1340 = vmatprep.subr.mxu0 0.0
      %1341 = vmatpush1.msra.mxu0 0.0
      %1342 = vmatprep.subr.mxu0 0.0
      %1343 = vmatpush1.msra.mxu0 0.0
      %1344 = vmatprep.subr.mxu0 0.0
      %1345 = vmatpush1.msra.mxu0 0.0
      %1346 = vmatprep.subr.mxu0 0.0
      %1347 = vmatpush1.msra.mxu0 0.0
      %1348 = vmatprep.subr.mxu0 0.0
      %1349 = vmatpush1.msra.mxu0 0.0
      %1350 = vmatprep.subr.mxu0 0.0
      %1351 = vmatpush1.msra.mxu0 0.0
      %1352 = vmatprep.subr.mxu0 0.0
      %1353 = vmatpush1.msra.mxu0 0.0
      %1354 = vmatprep.subr.mxu0 0.0
      %1355 = vmatpush1.msra.mxu0 0.0
      %1356 = vmatprep.subr.mxu0 0.0
      %1357 = vmatpush1.msra.mxu0 0.0
      %1358 = vmatprep.mubr.f32.mxu0 0.0
      %1359 = vmatmul.mubr.f32.gmra.mrb[0].mxu0 %v1058
      %v1360 = vpop.f32.mrb[0].mxu0
      %v1361 = vadd.f32 0.0, %v1360
      %v1362 = vpop.f32.mrb[0].mxu0
      %v1363 = vadd.f32 0.0, %v1362
      %1364 = vmatprep.mubr.f32.mxu0 0.0
      %1365 = vmatmul.mubr.f32.gmra.mrb[0].mxu0 %v1061
      %v1366 = vpop.f32.mrb[0].mxu0
      %v1367 = vadd.f32 0.0, %v1366
      %v1368 = vpop.f32.mrb[0].mxu0
      %v1369 = vadd.f32 0.0, %v1368
      %1370 = vdwg.mxu0
      %v1371 = vmul.f32 %v338, %v1130
      %v1372 = vmul.f32 %v340, %v1132
      %v1373 = vmul.f32 %v415, %v1207
      %v1374 = vmul.f32 %v417, %v1209
      %v1375 = vmul.f32 %v492, %v1284
      %v1376 = vmul.f32 %v494, %v1286
      %v1377 = vmul.f32 %v569, %v1361
      %v1378 = vmul.f32 %v571, %v1363
      %v1379 = vmul.f32 %v344, %v1136
      %v1380 = vmul.f32 %v346, %v1138
      %v1381 = vmul.f32 %v421, %v1213
      %v1382 = vmul.f32 %v423, %v1215
      %v1383 = vmul.f32 %v498, %v1290
      %v1384 = vmul.f32 %v500, %v1292
      %v1385 = vmul.f32 %v575, %v1367
      %v1386 = vmul.f32 %v577, %v1369
      %v1387 = vld [vmem:[%s4] sm:$0xff]
      %v1389 = vlaneseq
      %v1390 = vshrl.u32 %v1389, 7
      %v1391 = vsub.s32 0, %v1390
      %v1392 = vrot.slane %v1387, %v1391
      %v1393 = vlaneseq
      %v1394 = vshrl.u32 %v1393, 7
      %v1395 = vsub.s32 1, %v1394
      %v1396 = vrot.slane %v1387, %v1395
      %v1397 = vlaneseq
      %v1398 = vshrl.u32 %v1397, 7
      %v1399 = vsub.s32 2, %v1398
      %v1400 = vrot.slane %v1387, %v1399
      %v1401 = vlaneseq
      %v1402 = vshrl.u32 %v1401, 7
      %v1403 = vsub.s32 3, %v1402
      %v1404 = vrot.slane %v1387, %v1403
      %v1405 = vlaneseq
      %v1406 = vshrl.u32 %v1405, 7
      %v1407 = vsub.s32 4, %v1406
      %v1408 = vrot.slane %v1387, %v1407
      %v1409 = vlaneseq
      %v1410 = vshrl.u32 %v1409, 7
      %v1411 = vsub.s32 5, %v1410
      %v1412 = vrot.slane %v1387, %v1411
      %v1413 = vlaneseq
      %v1414 = vshrl.u32 %v1413, 7
      %v1415 = vsub.s32 6, %v1414
      %v1416 = vrot.slane %v1387, %v1415
      %v1417 = vlaneseq
      %v1418 = vshrl.u32 %v1417, 7
      %v1419 = vsub.s32 7, %v1418
      %v1420 = vrot.slane %v1387, %v1419
      %v1429 = vadd.f32 %v1371, %v1392
      %v1430 = vadd.f32 %v1372, %v1396
      %v1431 = vadd.f32 %v1373, %v1400
      %v1432 = vadd.f32 %v1374, %v1404
      %v1433 = vadd.f32 %v1375, %v1408
      %v1434 = vadd.f32 %v1376, %v1412
      %v1435 = vadd.f32 %v1377, %v1416
      %v1436 = vadd.f32 %v1378, %v1420
      %v1437 = vadd.f32 %v1379, %v1392
      %v1438 = vadd.f32 %v1380, %v1396
      %v1439 = vadd.f32 %v1381, %v1400
      %v1440 = vadd.f32 %v1382, %v1404
      %v1441 = vadd.f32 %v1383, %v1408
      %v1442 = vadd.f32 %v1384, %v1412
      %v1443 = vadd.f32 %v1385, %v1416
      %v1444 = vadd.f32 %v1386, %v1420
      %1445 = vst [vmem:[%s228] sm:$0xff] %v1429
      %1446 = vst [vmem:[%s228 + $0x8] sm:$0xff] %v1430
      %1447 = vst [vmem:[%s228 + $0x10] sm:$0xff] %v1431
      %1448 = vst [vmem:[%s228 + $0x18] sm:$0xff] %v1432
      %1449 = vst [vmem:[%s228 + $0x20] sm:$0xff] %v1433
      %1450 = vst [vmem:[%s228 + $0x28] sm:$0xff] %v1434
      %1451 = vst [vmem:[%s228 + $0x30] sm:$0xff] %v1435
      %1452 = vst [vmem:[%s228 + $0x38] sm:$0xff] %v1436
      %1453 = vst [vmem:[%s228 + $0x40] sm:$0xff] %v1437
      %1454 = vst [vmem:[%s228 + $0x48] sm:$0xff] %v1438
      %1455 = vst [vmem:[%s228 + $0x50] sm:$0xff] %v1439
      %1456 = vst [vmem:[%s228 + $0x58] sm:$0xff] %v1440
      %1457 = vst [vmem:[%s228 + $0x60] sm:$0xff] %v1441
      %1458 = vst [vmem:[%s228 + $0x68] sm:$0xff] %v1442
      %1459 = vst [vmem:[%s228 + $0x70] sm:$0xff] %v1443
      %1460 = vst [vmem:[%s228 + $0x78] sm:$0xff] %v1444
      %s1461 = smul.u32 2, %s16
      %p1462 = scmp.lt.s32.totalorder %s1461, 7
      %s1463 = scalar_select %p1462, %s1461, 7
      %s1464 = smul.addr %s1463, 8
      %s1465 = smul.addr %s1464, 8
      %s1466 = scalar_lea.vmem %s5, %s1465
      // Predicated region
      $region41: #{final_patch_expand_x4.1} parent=39 // pred_check
        %p1467 = pneg %p144
      $region42: #{final_patch_expand_x4.1} parent=39 // pred_check_branch
        %1469 = sbr.rel (%p1467) target = $region44
      $region43: #{final_patch_expand_x4.1} parent=39 // pred_region
        %s1470 = smul.u32 2, %s16
      $region44: #{final_patch_expand_x4.1} parent=39 // pred_fallthru
        _
    $region40: #{final_patch_expand_x4.1} parent=5 // pred_fallthru
      _
    %p1471 = scmp.le.s32.totalorder 2, %s11
    // Predicated region
    $region45: #{final_patch_expand_x4.1} parent=5 // pred_check
      %p1472 = pneg %p1471
    $region46: #{final_patch_expand_x4.1} parent=5 // pred_check_branch
      %1474 = sbr.rel (%p1472) target = $region48
    $region47: #{final_patch_expand_x4.1} parent=5 // pred_region
      %s1475 = ssub.s32 %s11, 2
      // Predicated region
      $region49: #{final_patch_expand_x4.1} parent=47 // pred_check
        %p1476 = pneg %p150
      $region50: #{final_patch_expand_x4.1} parent=47 // pred_check_branch
        %1478 = sbr.rel (%p1476) target = $region52
      $region51: #{final_patch_expand_x4.1} parent=47 // pred_region
        %s1479 = smul.u32 2, %s17
        %p1480 = scmp.lt.s32.totalorder %s1479, 7
        %s1481 = scalar_select %p1480, %s1479, 7
        %s1482 = smul.addr %s1481, 8
        %s1483 = smul.addr %s1482, 8
        %s1484 = scalar_lea.vmem %s5, %s1483
      $region52: #{final_patch_expand_x4.1} parent=47 // pred_fallthru
        _
    $region48: #{final_patch_expand_x4.1} parent=5 // pred_fallthru
      _
  $region6: #{final_patch_expand_x4.1} parent=0 // loop_footer
    %s15 = sadd.s32 1, %s11
  $region7: #{final_patch_expand_x4.1} parent=0 // loop_footer_branch
    %10 = sbr.rel target = $region3
  $region8: #{final_patch_expand_x4.1} parent=0 // loop_exit
    _

</llo_original>
